<compile_context>
chip_gen: v7x
topology: tpu7x:2x2x1
jax: 0.10.0
libtpu: 0.0.40
codegen_flags: <defaults>
</compile_context>

<pallas_src>
import jax
import jax.numpy as jnp
from jax.experimental import pallas as pl
from jax.experimental.pallas import tpu as pltpu


def _down_kernel(w_ref, b_ref, x_ref, o_ref):
    """One (batch, row-block) step of Conv2d(C, C, 3, 2, 1) + LeakyReLU(0.01).

    w_ref : SMEM (C_out*C_in*9,) f32, PyTorch (co, ci, kh, kw) row-major order.
    b_ref : SMEM (C_out,) f32.
    x_ref : VMEM (6*C_in, th, Wo+1) f32 -- 6 stride-2 tap planes per in-channel;
            plane index within a channel = 2*kh + column_parity.
    o_ref : VMEM (C_out, th, Wo) f32 -- NCHW output block (lanes = Wo).
    """
    six_c, th, _ = x_ref.shape
    c_out, _, wo = o_ref.shape
    c_in = six_c // 6

    # Load each tap plane once (re-used by every output channel).
    planes = [x_ref[i] for i in range(six_c)]

    # taps[3*kh + kw][ci] is the (th, Wo) window  x_pad[2*ho + kh, 2*wo + kw].
    taps = []
    for kh in range(3):
        for kw in range(3):
            plane = 2 * kh + (1 if kw == 1 else 0)   # column parity of this tap
            dw = 1 if kw == 2 else 0                 # +1 column inside the plane
            taps.append(
                [planes[plane * c_in + ci][:, dw:dw + wo] for ci in range(c_in)]
            )

    # Direct conv: 9*C_in scalar-broadcast MACs per output channel on the VPU.
    for co in range(c_out):
        acc = jnp.zeros((th, wo), jnp.float32)
        for ci in range(c_in):
            base = (co * c_in + ci) * 9
            for t in range(9):
                acc = acc + w_ref[base + t] * taps[t][ci]
        acc = acc + b_ref[co]
        # LeakyReLU, PyTorch default negative_slope = 0.01
        o_ref[co] = jnp.where(acc >= 0, acc, 0.01 * acc).astype(o_ref.dtype)


def _pick_block_rows(ho, c, wo, budget_bytes=12 * 1024 * 1024):
    """Largest output-row block that keeps the double-buffered working set small."""
    def need(th):  # 2x (input block + output block), f32
        return 2 * 4 * th * (6 * c * (wo + 1) + c * wo)

    if ho <= 8 or need(ho) <= budget_bytes:
        return ho
    best = None
    for th in range(8, ho, 8):               # (8,128) rule: th multiple of 8 or == Ho
        if ho % th == 0 and need(th) <= budget_bytes:
            best = th
    # TODO(synk): add halo-based H splitting for the (rare) case where no
    # multiple-of-8 divisor of Ho fits the budget.
    return best if best is not None else ho


def downsampling_forward(x_nchw, weight, bias):
    """Conv2d(C, C, 3, stride=2, padding=1) + LeakyReLU, matching PyTorch.

    x_nchw : (N, C, H, W) float32
    weight : (C_out, C_in, 3, 3) float32 (PyTorch layout)
    bias   : (C_out,) float32
    returns: (N, C, H_out, W_out) float32 (NCHW, same as the PyTorch module)
    """
    N, C, H, W = x_nchw.shape
    C_out, C_in, KH, KW = weight.shape
    assert (C_out, C_in, KH, KW) == (C, C, 3, 3)
    Ho = (H - 1) // 2 + 1
    Wo = (W - 1) // 2 + 1

    x = x_nchw.astype(jnp.float32)
    # Zero pad: 1 on top/left; just enough on bottom/right for the stride-2 taps
    # (matches Conv2d padding=1 -- the unused pad row/col contributes nothing).
    pad_b = 2 * Ho - H            # 0 if H even else 1
    pad_r = 2 * Wo + 1 - W        # 1 if W even else 2
    xp = jnp.pad(x, ((0, 0), (0, 0), (1, pad_b), (1, pad_r)))

    # 6 stride-2 tap planes: 3 row taps (kh) x 2 column parities, each (N,C,Ho,Wo+1).
    # Plane (2*kh + p)[n, c, j, m] == x_pad[n, c, 2*j + kh, 2*m + p].
    planes = []
    for kh in range(3):
        rows = xp[:, :, kh:kh + 2 * Ho:2, :]                 # (N, C, Ho, W_pad)
        for p in range(2):
            planes.append(rows[:, :, :, p:p + 2 * Wo + 1:2])  # (N, C, Ho, Wo+1)
    xsrc = jnp.stack(planes, axis=1).reshape(N, 6 * C, Ho, Wo + 1)

    w_flat = weight.astype(jnp.float32).reshape(-1)          # (C_out*C_in*9,)
    b_flat = bias.astype(jnp.float32)                        # (C_out,)

    th = _pick_block_rows(Ho, C, Wo)
    n_hblk = Ho // th

    flops = 2 * N * C_out * C_in * 9 * Ho * Wo
    bytes_accessed = 4 * (xsrc.size + N * C_out * Ho * Wo + w_flat.size + b_flat.size)

    out = pl.pallas_call(
        _down_kernel,
        out_shape=jax.ShapeDtypeStruct((N, C_out, Ho, Wo), jnp.float32),
        grid=(N, n_hblk),
        in_specs=[
            pl.BlockSpec(memory_space=pltpu.MemorySpace.SMEM),               # weights
            pl.BlockSpec(memory_space=pltpu.MemorySpace.SMEM),               # bias
            pl.BlockSpec((None, 6 * C, th, Wo + 1), lambda n, h: (n, 0, h, 0)),
        ],
        out_specs=pl.BlockSpec((None, C_out, th, Wo), lambda n, h: (n, 0, h, 0)),
        compiler_params=pltpu.CompilerParams(
            dimension_semantics=("parallel", "parallel"),
            vmem_limit_bytes=32 * 1024 * 1024,
        ),
        cost_estimate=pl.CostEstimate(
            flops=flops, transcendentals=0, bytes_accessed=bytes_accessed),
    )(w_flat, b_flat, xsrc)
    return out


def _reference(x_nchw, weight, bias):
    """Pure-JAX reference (lax.conv) for correctness check."""
    y = jax.lax.conv_general_dilated(
        x_nchw, weight,
        window_strides=(2, 2), padding=((1, 1), (1, 1)),
        dimension_numbers=("NCHW", "OIHW", "NCHW"),
    )
    y = y + bias.reshape(1, -1, 1, 1)
    return jnp.where(y > 0, y, 0.01 * y)


if __name__ == "__main__":
    key = jax.random.PRNGKey(0)
    k_x, k_w, k_b = jax.random.split(key, 3)

    N, C, H, W = 2, 4, 16, 16
    x = jax.random.normal(k_x, (N, C, H, W), dtype=jnp.float32)

    # Deterministic parameter init (PyTorch Conv2d default: U(-1/sqrt(fan_in), +))
    fan_in = C * 3 * 3
    bound = 1.0 / (fan_in ** 0.5)
    weight = jax.random.uniform(k_w, (C, C, 3, 3), jnp.float32, -bound, bound)
    bias = jax.random.uniform(k_b, (C,), jnp.float32, -bound, bound)

    fwd = jax.jit(downsampling_forward)
    out = jax.block_until_ready(fwd(x, weight, bias))

    ref = jax.block_until_ready(_reference(x, weight, bias))
    assert out.shape == (N, C, H // 2, W // 2), out.shape
    assert jnp.allclose(out, ref, rtol=1e-3, atol=1e-3), "mismatch vs reference"

    print("KERNEL_OK")
</pallas_src>

<mosaic_0001>
module attributes {stable_mosaic.version = 11 : i64} {
  func.func @_down_kernel(%arg0: i32, %arg1: i32, %arg2: memref<144xf32, #tpu.memory_space<smem>>, %arg3: memref<4xf32, #tpu.memory_space<smem>>, %arg4: memref<1x24x8x9xf32, #tpu.memory_space<vmem>>, %arg5: memref<1x4x8x8xf32, #tpu.memory_space<vmem>>) attributes {dimension_semantics = [#tpu.dimension_semantics<parallel>, #tpu.dimension_semantics<parallel>], iteration_bounds = array<i64: 2, 1>, scalar_prefetch = 0 : i64, scratch_operands = 0 : i64, tpu.core_type = #tpu.core_type<tc>, window_params = [{transform_indices = @transform_0, window_bounds = array<i64: 144>}, {transform_indices = @transform_1, window_bounds = array<i64: 4>}, {transform_indices = @transform_2, window_bounds = array<i64: 1, 24, 8, 9>}, {transform_indices = @transform_3, window_bounds = array<i64: 1, 4, 8, 8>}]} {
    %c0 = arith.constant 0 : index
    %c0_0 = arith.constant 0 : index
    %c0_1 = arith.constant 0 : index
    %c0_2 = arith.constant 0 : index
    %0 = vector.load %arg4[%c0, %c0_0, %c0_1, %c0_2] : memref<1x24x8x9xf32, #tpu.memory_space<vmem>>, vector<1x1x8x9xf32>
    %1 = vector.shape_cast %0 : vector<1x1x8x9xf32> to vector<8x9xf32>
    %c0_3 = arith.constant 0 : index
    %c1 = arith.constant 1 : index
    %c0_4 = arith.constant 0 : index
    %c0_5 = arith.constant 0 : index
    %2 = vector.load %arg4[%c0_3, %c1, %c0_4, %c0_5] : memref<1x24x8x9xf32, #tpu.memory_space<vmem>>, vector<1x1x8x9xf32>
    %3 = vector.shape_cast %2 : vector<1x1x8x9xf32> to vector<8x9xf32>
    %c0_6 = arith.constant 0 : index
    %c2 = arith.constant 2 : index
    %c0_7 = arith.constant 0 : index
    %c0_8 = arith.constant 0 : index
    %4 = vector.load %arg4[%c0_6, %c2, %c0_7, %c0_8] : memref<1x24x8x9xf32, #tpu.memory_space<vmem>>, vector<1x1x8x9xf32>
    %5 = vector.shape_cast %4 : vector<1x1x8x9xf32> to vector<8x9xf32>
    %c0_9 = arith.constant 0 : index
    %c3 = arith.constant 3 : index
    %c0_10 = arith.constant 0 : index
    %c0_11 = arith.constant 0 : index
    %6 = vector.load %arg4[%c0_9, %c3, %c0_10, %c0_11] : memref<1x24x8x9xf32, #tpu.memory_space<vmem>>, vector<1x1x8x9xf32>
    %7 = vector.shape_cast %6 : vector<1x1x8x9xf32> to vector<8x9xf32>
    %c0_12 = arith.constant 0 : index
    %c4 = arith.constant 4 : index
    %c0_13 = arith.constant 0 : index
    %c0_14 = arith.constant 0 : index
    %8 = vector.load %arg4[%c0_12, %c4, %c0_13, %c0_14] : memref<1x24x8x9xf32, #tpu.memory_space<vmem>>, vector<1x1x8x9xf32>
    %9 = vector.shape_cast %8 : vector<1x1x8x9xf32> to vector<8x9xf32>
    %c0_15 = arith.constant 0 : index
    %c5 = arith.constant 5 : index
    %c0_16 = arith.constant 0 : index
    %c0_17 = arith.constant 0 : index
    %10 = vector.load %arg4[%c0_15, %c5, %c0_16, %c0_17] : memref<1x24x8x9xf32, #tpu.memory_space<vmem>>, vector<1x1x8x9xf32>
    %11 = vector.shape_cast %10 : vector<1x1x8x9xf32> to vector<8x9xf32>
    %c0_18 = arith.constant 0 : index
    %c6 = arith.constant 6 : index
    %c0_19 = arith.constant 0 : index
    %c0_20 = arith.constant 0 : index
    %12 = vector.load %arg4[%c0_18, %c6, %c0_19, %c0_20] : memref<1x24x8x9xf32, #tpu.memory_space<vmem>>, vector<1x1x8x9xf32>
    %13 = vector.shape_cast %12 : vector<1x1x8x9xf32> to vector<8x9xf32>
    %c0_21 = arith.constant 0 : index
    %c7 = arith.constant 7 : index
    %c0_22 = arith.constant 0 : index
    %c0_23 = arith.constant 0 : index
    %14 = vector.load %arg4[%c0_21, %c7, %c0_22, %c0_23] : memref<1x24x8x9xf32, #tpu.memory_space<vmem>>, vector<1x1x8x9xf32>
    %15 = vector.shape_cast %14 : vector<1x1x8x9xf32> to vector<8x9xf32>
    %c0_24 = arith.constant 0 : index
    %c8 = arith.constant 8 : index
    %c0_25 = arith.constant 0 : index
    %c0_26 = arith.constant 0 : index
    %16 = vector.load %arg4[%c0_24, %c8, %c0_25, %c0_26] : memref<1x24x8x9xf32, #tpu.memory_space<vmem>>, vector<1x1x8x9xf32>
    %17 = vector.shape_cast %16 : vector<1x1x8x9xf32> to vector<8x9xf32>
    %c0_27 = arith.constant 0 : index
    %c9 = arith.constant 9 : index
    %c0_28 = arith.constant 0 : index
    %c0_29 = arith.constant 0 : index
    %18 = vector.load %arg4[%c0_27, %c9, %c0_28, %c0_29] : memref<1x24x8x9xf32, #tpu.memory_space<vmem>>, vector<1x1x8x9xf32>
    %19 = vector.shape_cast %18 : vector<1x1x8x9xf32> to vector<8x9xf32>
    %c0_30 = arith.constant 0 : index
    %c10 = arith.constant 10 : index
    %c0_31 = arith.constant 0 : index
    %c0_32 = arith.constant 0 : index
    %20 = vector.load %arg4[%c0_30, %c10, %c0_31, %c0_32] : memref<1x24x8x9xf32, #tpu.memory_space<vmem>>, vector<1x1x8x9xf32>
    %21 = vector.shape_cast %20 : vector<1x1x8x9xf32> to vector<8x9xf32>
    %c0_33 = arith.constant 0 : index
    %c11 = arith.constant 11 : index
    %c0_34 = arith.constant 0 : index
    %c0_35 = arith.constant 0 : index
    %22 = vector.load %arg4[%c0_33, %c11, %c0_34, %c0_35] : memref<1x24x8x9xf32, #tpu.memory_space<vmem>>, vector<1x1x8x9xf32>
    %23 = vector.shape_cast %22 : vector<1x1x8x9xf32> to vector<8x9xf32>
    %c0_36 = arith.constant 0 : index
    %c12 = arith.constant 12 : index
    %c0_37 = arith.constant 0 : index
    %c0_38 = arith.constant 0 : index
    %24 = vector.load %arg4[%c0_36, %c12, %c0_37, %c0_38] : memref<1x24x8x9xf32, #tpu.memory_space<vmem>>, vector<1x1x8x9xf32>
    %25 = vector.shape_cast %24 : vector<1x1x8x9xf32> to vector<8x9xf32>
    %c0_39 = arith.constant 0 : index
    %c13 = arith.constant 13 : index
    %c0_40 = arith.constant 0 : index
    %c0_41 = arith.constant 0 : index
    %26 = vector.load %arg4[%c0_39, %c13, %c0_40, %c0_41] : memref<1x24x8x9xf32, #tpu.memory_space<vmem>>, vector<1x1x8x9xf32>
    %27 = vector.shape_cast %26 : vector<1x1x8x9xf32> to vector<8x9xf32>
    %c0_42 = arith.constant 0 : index
    %c14 = arith.constant 14 : index
    %c0_43 = arith.constant 0 : index
    %c0_44 = arith.constant 0 : index
    %28 = vector.load %arg4[%c0_42, %c14, %c0_43, %c0_44] : memref<1x24x8x9xf32, #tpu.memory_space<vmem>>, vector<1x1x8x9xf32>
    %29 = vector.shape_cast %28 : vector<1x1x8x9xf32> to vector<8x9xf32>
    %c0_45 = arith.constant 0 : index
    %c15 = arith.constant 15 : index
    %c0_46 = arith.constant 0 : index
    %c0_47 = arith.constant 0 : index
    %30 = vector.load %arg4[%c0_45, %c15, %c0_46, %c0_47] : memref<1x24x8x9xf32, #tpu.memory_space<vmem>>, vector<1x1x8x9xf32>
    %31 = vector.shape_cast %30 : vector<1x1x8x9xf32> to vector<8x9xf32>
    %c0_48 = arith.constant 0 : index
    %c16 = arith.constant 16 : index
    %c0_49 = arith.constant 0 : index
    %c0_50 = arith.constant 0 : index
    %32 = vector.load %arg4[%c0_48, %c16, %c0_49, %c0_50] : memref<1x24x8x9xf32, #tpu.memory_space<vmem>>, vector<1x1x8x9xf32>
    %33 = vector.shape_cast %32 : vector<1x1x8x9xf32> to vector<8x9xf32>
    %c0_51 = arith.constant 0 : index
    %c17 = arith.constant 17 : index
    %c0_52 = arith.constant 0 : index
    %c0_53 = arith.constant 0 : index
    %34 = vector.load %arg4[%c0_51, %c17, %c0_52, %c0_53] : memref<1x24x8x9xf32, #tpu.memory_space<vmem>>, vector<1x1x8x9xf32>
    %35 = vector.shape_cast %34 : vector<1x1x8x9xf32> to vector<8x9xf32>
    %c0_54 = arith.constant 0 : index
    %c18 = arith.constant 18 : index
    %c0_55 = arith.constant 0 : index
    %c0_56 = arith.constant 0 : index
    %36 = vector.load %arg4[%c0_54, %c18, %c0_55, %c0_56] : memref<1x24x8x9xf32, #tpu.memory_space<vmem>>, vector<1x1x8x9xf32>
    %37 = vector.shape_cast %36 : vector<1x1x8x9xf32> to vector<8x9xf32>
    %c0_57 = arith.constant 0 : index
    %c19 = arith.constant 19 : index
    %c0_58 = arith.constant 0 : index
    %c0_59 = arith.constant 0 : index
    %38 = vector.load %arg4[%c0_57, %c19, %c0_58, %c0_59] : memref<1x24x8x9xf32, #tpu.memory_space<vmem>>, vector<1x1x8x9xf32>
    %39 = vector.shape_cast %38 : vector<1x1x8x9xf32> to vector<8x9xf32>
    %c0_60 = arith.constant 0 : index
    %c20 = arith.constant 20 : index
    %c0_61 = arith.constant 0 : index
    %c0_62 = arith.constant 0 : index
    %40 = vector.load %arg4[%c0_60, %c20, %c0_61, %c0_62] : memref<1x24x8x9xf32, #tpu.memory_space<vmem>>, vector<1x1x8x9xf32>
    %41 = vector.shape_cast %40 : vector<1x1x8x9xf32> to vector<8x9xf32>
    %c0_63 = arith.constant 0 : index
    %c21 = arith.constant 21 : index
    %c0_64 = arith.constant 0 : index
    %c0_65 = arith.constant 0 : index
    %42 = vector.load %arg4[%c0_63, %c21, %c0_64, %c0_65] : memref<1x24x8x9xf32, #tpu.memory_space<vmem>>, vector<1x1x8x9xf32>
    %43 = vector.shape_cast %42 : vector<1x1x8x9xf32> to vector<8x9xf32>
    %c0_66 = arith.constant 0 : index
    %c22 = arith.constant 22 : index
    %c0_67 = arith.constant 0 : index
    %c0_68 = arith.constant 0 : index
    %44 = vector.load %arg4[%c0_66, %c22, %c0_67, %c0_68] : memref<1x24x8x9xf32, #tpu.memory_space<vmem>>, vector<1x1x8x9xf32>
    %45 = vector.shape_cast %44 : vector<1x1x8x9xf32> to vector<8x9xf32>
    %c0_69 = arith.constant 0 : index
    %c23 = arith.constant 23 : index
    %c0_70 = arith.constant 0 : index
    %c0_71 = arith.constant 0 : index
    %46 = vector.load %arg4[%c0_69, %c23, %c0_70, %c0_71] : memref<1x24x8x9xf32, #tpu.memory_space<vmem>>, vector<1x1x8x9xf32>
    %47 = vector.shape_cast %46 : vector<1x1x8x9xf32> to vector<8x9xf32>
    %48 = vector.extract_strided_slice %1 {offsets = [0, 0], sizes = [8, 8], strides = [1, 1]} : vector<8x9xf32> to vector<8x8xf32>
    %49 = vector.extract_strided_slice %3 {offsets = [0, 0], sizes = [8, 8], strides = [1, 1]} : vector<8x9xf32> to vector<8x8xf32>
    %50 = vector.extract_strided_slice %5 {offsets = [0, 0], sizes = [8, 8], strides = [1, 1]} : vector<8x9xf32> to vector<8x8xf32>
    %51 = vector.extract_strided_slice %7 {offsets = [0, 0], sizes = [8, 8], strides = [1, 1]} : vector<8x9xf32> to vector<8x8xf32>
    %52 = vector.extract_strided_slice %9 {offsets = [0, 0], sizes = [8, 8], strides = [1, 1]} : vector<8x9xf32> to vector<8x8xf32>
    %53 = vector.extract_strided_slice %11 {offsets = [0, 0], sizes = [8, 8], strides = [1, 1]} : vector<8x9xf32> to vector<8x8xf32>
    %54 = vector.extract_strided_slice %13 {offsets = [0, 0], sizes = [8, 8], strides = [1, 1]} : vector<8x9xf32> to vector<8x8xf32>
    %55 = vector.extract_strided_slice %15 {offsets = [0, 0], sizes = [8, 8], strides = [1, 1]} : vector<8x9xf32> to vector<8x8xf32>
    %56 = vector.extract_strided_slice %1 {offsets = [0, 1], sizes = [8, 8], strides = [1, 1]} : vector<8x9xf32> to vector<8x8xf32>
    %57 = vector.extract_strided_slice %3 {offsets = [0, 1], sizes = [8, 8], strides = [1, 1]} : vector<8x9xf32> to vector<8x8xf32>
    %58 = vector.extract_strided_slice %5 {offsets = [0, 1], sizes = [8, 8], strides = [1, 1]} : vector<8x9xf32> to vector<8x8xf32>
    %59 = vector.extract_strided_slice %7 {offsets = [0, 1], sizes = [8, 8], strides = [1, 1]} : vector<8x9xf32> to vector<8x8xf32>
    %60 = vector.extract_strided_slice %17 {offsets = [0, 0], sizes = [8, 8], strides = [1, 1]} : vector<8x9xf32> to vector<8x8xf32>
    %61 = vector.extract_strided_slice %19 {offsets = [0, 0], sizes = [8, 8], strides = [1, 1]} : vector<8x9xf32> to vector<8x8xf32>
    %62 = vector.extract_strided_slice %21 {offsets = [0, 0], sizes = [8, 8], strides = [1, 1]} : vector<8x9xf32> to vector<8x8xf32>
    %63 = vector.extract_strided_slice %23 {offsets = [0, 0], sizes = [8, 8], strides = [1, 1]} : vector<8x9xf32> to vector<8x8xf32>
    %64 = vector.extract_strided_slice %25 {offsets = [0, 0], sizes = [8, 8], strides = [1, 1]} : vector<8x9xf32> to vector<8x8xf32>
    %65 = vector.extract_strided_slice %27 {offsets = [0, 0], sizes = [8, 8], strides = [1, 1]} : vector<8x9xf32> to vector<8x8xf32>
    %66 = vector.extract_strided_slice %29 {offsets = [0, 0], sizes = [8, 8], strides = [1, 1]} : vector<8x9xf32> to vector<8x8xf32>
    %67 = vector.extract_strided_slice %31 {offsets = [0, 0], sizes = [8, 8], strides = [1, 1]} : vector<8x9xf32> to vector<8x8xf32>
    %68 = vector.extract_strided_slice %17 {offsets = [0, 1], sizes = [8, 8], strides = [1, 1]} : vector<8x9xf32> to vector<8x8xf32>
    %69 = vector.extract_strided_slice %19 {offsets = [0, 1], sizes = [8, 8], strides = [1, 1]} : vector<8x9xf32> to vector<8x8xf32>
    %70 = vector.extract_strided_slice %21 {offsets = [0, 1], sizes = [8, 8], strides = [1, 1]} : vector<8x9xf32> to vector<8x8xf32>
    %71 = vector.extract_strided_slice %23 {offsets = [0, 1], sizes = [8, 8], strides = [1, 1]} : vector<8x9xf32> to vector<8x8xf32>
    %72 = vector.extract_strided_slice %33 {offsets = [0, 0], sizes = [8, 8], strides = [1, 1]} : vector<8x9xf32> to vector<8x8xf32>
    %73 = vector.extract_strided_slice %35 {offsets = [0, 0], sizes = [8, 8], strides = [1, 1]} : vector<8x9xf32> to vector<8x8xf32>
    %74 = vector.extract_strided_slice %37 {offsets = [0, 0], sizes = [8, 8], strides = [1, 1]} : vector<8x9xf32> to vector<8x8xf32>
    %75 = vector.extract_strided_slice %39 {offsets = [0, 0], sizes = [8, 8], strides = [1, 1]} : vector<8x9xf32> to vector<8x8xf32>
    %76 = vector.extract_strided_slice %41 {offsets = [0, 0], sizes = [8, 8], strides = [1, 1]} : vector<8x9xf32> to vector<8x8xf32>
    %77 = vector.extract_strided_slice %43 {offsets = [0, 0], sizes = [8, 8], strides = [1, 1]} : vector<8x9xf32> to vector<8x8xf32>
    %78 = vector.extract_strided_slice %45 {offsets = [0, 0], sizes = [8, 8], strides = [1, 1]} : vector<8x9xf32> to vector<8x8xf32>
    %79 = vector.extract_strided_slice %47 {offsets = [0, 0], sizes = [8, 8], strides = [1, 1]} : vector<8x9xf32> to vector<8x8xf32>
    %80 = vector.extract_strided_slice %33 {offsets = [0, 1], sizes = [8, 8], strides = [1, 1]} : vector<8x9xf32> to vector<8x8xf32>
    %81 = vector.extract_strided_slice %35 {offsets = [0, 1], sizes = [8, 8], strides = [1, 1]} : vector<8x9xf32> to vector<8x8xf32>
    %82 = vector.extract_strided_slice %37 {offsets = [0, 1], sizes = [8, 8], strides = [1, 1]} : vector<8x9xf32> to vector<8x8xf32>
    %83 = vector.extract_strided_slice %39 {offsets = [0, 1], sizes = [8, 8], strides = [1, 1]} : vector<8x9xf32> to vector<8x8xf32>
    %cst = arith.constant 0.000000e+00 : f32
    %84 = vector.broadcast %cst : f32 to vector<8x8xf32>
    %c0_72 = arith.constant 0 : index
    %85 = memref.load %arg2[%c0_72] : memref<144xf32, #tpu.memory_space<smem>>
    %86 = vector.broadcast %85 : f32 to vector<8x8xf32>
    %87 = arith.mulf %86, %48 : vector<8x8xf32>
    %88 = arith.addf %84, %87 : vector<8x8xf32>
    %c1_73 = arith.constant 1 : index
    %89 = memref.load %arg2[%c1_73] : memref<144xf32, #tpu.memory_space<smem>>
    %90 = vector.broadcast %89 : f32 to vector<8x8xf32>
    %91 = arith.mulf %90, %52 : vector<8x8xf32>
    %92 = arith.addf %88, %91 : vector<8x8xf32>
    %c2_74 = arith.constant 2 : index
    %93 = memref.load %arg2[%c2_74] : memref<144xf32, #tpu.memory_space<smem>>
    %94 = vector.broadcast %93 : f32 to vector<8x8xf32>
    %95 = arith.mulf %94, %56 : vector<8x8xf32>
    %96 = arith.addf %92, %95 : vector<8x8xf32>
    %c3_75 = arith.constant 3 : index
    %97 = memref.load %arg2[%c3_75] : memref<144xf32, #tpu.memory_space<smem>>
    %98 = vector.broadcast %97 : f32 to vector<8x8xf32>
    %99 = arith.mulf %98, %60 : vector<8x8xf32>
    %100 = arith.addf %96, %99 : vector<8x8xf32>
    %c4_76 = arith.constant 4 : index
    %101 = memref.load %arg2[%c4_76] : memref<144xf32, #tpu.memory_space<smem>>
    %102 = vector.broadcast %101 : f32 to vector<8x8xf32>
    %103 = arith.mulf %102, %64 : vector<8x8xf32>
    %104 = arith.addf %100, %103 : vector<8x8xf32>
    %c5_77 = arith.constant 5 : index
    %105 = memref.load %arg2[%c5_77] : memref<144xf32, #tpu.memory_space<smem>>
    %106 = vector.broadcast %105 : f32 to vector<8x8xf32>
    %107 = arith.mulf %106, %68 : vector<8x8xf32>
    %108 = arith.addf %104, %107 : vector<8x8xf32>
    %c6_78 = arith.constant 6 : index
    %109 = memref.load %arg2[%c6_78] : memref<144xf32, #tpu.memory_space<smem>>
    %110 = vector.broadcast %109 : f32 to vector<8x8xf32>
    %111 = arith.mulf %110, %72 : vector<8x8xf32>
    %112 = arith.addf %108, %111 : vector<8x8xf32>
    %c7_79 = arith.constant 7 : index
    %113 = memref.load %arg2[%c7_79] : memref<144xf32, #tpu.memory_space<smem>>
    %114 = vector.broadcast %113 : f32 to vector<8x8xf32>
    %115 = arith.mulf %114, %76 : vector<8x8xf32>
    %116 = arith.addf %112, %115 : vector<8x8xf32>
    %c8_80 = arith.constant 8 : index
    %117 = memref.load %arg2[%c8_80] : memref<144xf32, #tpu.memory_space<smem>>
    %118 = vector.broadcast %117 : f32 to vector<8x8xf32>
    %119 = arith.mulf %118, %80 : vector<8x8xf32>
    %120 = arith.addf %116, %119 : vector<8x8xf32>
    %c9_81 = arith.constant 9 : index
    %121 = memref.load %arg2[%c9_81] : memref<144xf32, #tpu.memory_space<smem>>
    %122 = vector.broadcast %121 : f32 to vector<8x8xf32>
    %123 = arith.mulf %122, %49 : vector<8x8xf32>
    %124 = arith.addf %120, %123 : vector<8x8xf32>
    %c10_82 = arith.constant 10 : index
    %125 = memref.load %arg2[%c10_82] : memref<144xf32, #tpu.memory_space<smem>>
    %126 = vector.broadcast %125 : f32 to vector<8x8xf32>
    %127 = arith.mulf %126, %53 : vector<8x8xf32>
    %128 = arith.addf %124, %127 : vector<8x8xf32>
    %c11_83 = arith.constant 11 : index
    %129 = memref.load %arg2[%c11_83] : memref<144xf32, #tpu.memory_space<smem>>
    %130 = vector.broadcast %129 : f32 to vector<8x8xf32>
    %131 = arith.mulf %130, %57 : vector<8x8xf32>
    %132 = arith.addf %128, %131 : vector<8x8xf32>
    %c12_84 = arith.constant 12 : index
    %133 = memref.load %arg2[%c12_84] : memref<144xf32, #tpu.memory_space<smem>>
    %134 = vector.broadcast %133 : f32 to vector<8x8xf32>
    %135 = arith.mulf %134, %61 : vector<8x8xf32>
    %136 = arith.addf %132, %135 : vector<8x8xf32>
    %c13_85 = arith.constant 13 : index
    %137 = memref.load %arg2[%c13_85] : memref<144xf32, #tpu.memory_space<smem>>
    %138 = vector.broadcast %137 : f32 to vector<8x8xf32>
    %139 = arith.mulf %138, %65 : vector<8x8xf32>
    %140 = arith.addf %136, %139 : vector<8x8xf32>
    %c14_86 = arith.constant 14 : index
    %141 = memref.load %arg2[%c14_86] : memref<144xf32, #tpu.memory_space<smem>>
    %142 = vector.broadcast %141 : f32 to vector<8x8xf32>
    %143 = arith.mulf %142, %69 : vector<8x8xf32>
    %144 = arith.addf %140, %143 : vector<8x8xf32>
    %c15_87 = arith.constant 15 : index
    %145 = memref.load %arg2[%c15_87] : memref<144xf32, #tpu.memory_space<smem>>
    %146 = vector.broadcast %145 : f32 to vector<8x8xf32>
    %147 = arith.mulf %146, %73 : vector<8x8xf32>
    %148 = arith.addf %144, %147 : vector<8x8xf32>
    %c16_88 = arith.constant 16 : index
    %149 = memref.load %arg2[%c16_88] : memref<144xf32, #tpu.memory_space<smem>>
    %150 = vector.broadcast %149 : f32 to vector<8x8xf32>
    %151 = arith.mulf %150, %77 : vector<8x8xf32>
    %152 = arith.addf %148, %151 : vector<8x8xf32>
    %c17_89 = arith.constant 17 : index
    %153 = memref.load %arg2[%c17_89] : memref<144xf32, #tpu.memory_space<smem>>
    %154 = vector.broadcast %153 : f32 to vector<8x8xf32>
    %155 = arith.mulf %154, %81 : vector<8x8xf32>
    %156 = arith.addf %152, %155 : vector<8x8xf32>
    %c18_90 = arith.constant 18 : index
    %157 = memref.load %arg2[%c18_90] : memref<144xf32, #tpu.memory_space<smem>>
    %158 = vector.broadcast %157 : f32 to vector<8x8xf32>
    %159 = arith.mulf %158, %50 : vector<8x8xf32>
    %160 = arith.addf %156, %159 : vector<8x8xf32>
    %c19_91 = arith.constant 19 : index
    %161 = memref.load %arg2[%c19_91] : memref<144xf32, #tpu.memory_space<smem>>
    %162 = vector.broadcast %161 : f32 to vector<8x8xf32>
    %163 = arith.mulf %162, %54 : vector<8x8xf32>
    %164 = arith.addf %160, %163 : vector<8x8xf32>
    %c20_92 = arith.constant 20 : index
    %165 = memref.load %arg2[%c20_92] : memref<144xf32, #tpu.memory_space<smem>>
    %166 = vector.broadcast %165 : f32 to vector<8x8xf32>
    %167 = arith.mulf %166, %58 : vector<8x8xf32>
    %168 = arith.addf %164, %167 : vector<8x8xf32>
    %c21_93 = arith.constant 21 : index
    %169 = memref.load %arg2[%c21_93] : memref<144xf32, #tpu.memory_space<smem>>
    %170 = vector.broadcast %169 : f32 to vector<8x8xf32>
    %171 = arith.mulf %170, %62 : vector<8x8xf32>
    %172 = arith.addf %168, %171 : vector<8x8xf32>
    %c22_94 = arith.constant 22 : index
    %173 = memref.load %arg2[%c22_94] : memref<144xf32, #tpu.memory_space<smem>>
    %174 = vector.broadcast %173 : f32 to vector<8x8xf32>
    %175 = arith.mulf %174, %66 : vector<8x8xf32>
    %176 = arith.addf %172, %175 : vector<8x8xf32>
    %c23_95 = arith.constant 23 : index
    %177 = memref.load %arg2[%c23_95] : memref<144xf32, #tpu.memory_space<smem>>
    %178 = vector.broadcast %177 : f32 to vector<8x8xf32>
    %179 = arith.mulf %178, %70 : vector<8x8xf32>
    %180 = arith.addf %176, %179 : vector<8x8xf32>
    %c24 = arith.constant 24 : index
    %181 = memref.load %arg2[%c24] : memref<144xf32, #tpu.memory_space<smem>>
    %182 = vector.broadcast %181 : f32 to vector<8x8xf32>
    %183 = arith.mulf %182, %74 : vector<8x8xf32>
    %184 = arith.addf %180, %183 : vector<8x8xf32>
    %c25 = arith.constant 25 : index
    %185 = memref.load %arg2[%c25] : memref<144xf32, #tpu.memory_space<smem>>
    %186 = vector.broadcast %185 : f32 to vector<8x8xf32>
    %187 = arith.mulf %186, %78 : vector<8x8xf32>
    %188 = arith.addf %184, %187 : vector<8x8xf32>
    %c26 = arith.constant 26 : index
    %189 = memref.load %arg2[%c26] : memref<144xf32, #tpu.memory_space<smem>>
    %190 = vector.broadcast %189 : f32 to vector<8x8xf32>
    %191 = arith.mulf %190, %82 : vector<8x8xf32>
    %192 = arith.addf %188, %191 : vector<8x8xf32>
    %c27 = arith.constant 27 : index
    %193 = memref.load %arg2[%c27] : memref<144xf32, #tpu.memory_space<smem>>
    %194 = vector.broadcast %193 : f32 to vector<8x8xf32>
    %195 = arith.mulf %194, %51 : vector<8x8xf32>
    %196 = arith.addf %192, %195 : vector<8x8xf32>
    %c28 = arith.constant 28 : index
    %197 = memref.load %arg2[%c28] : memref<144xf32, #tpu.memory_space<smem>>
    %198 = vector.broadcast %197 : f32 to vector<8x8xf32>
    %199 = arith.mulf %198, %55 : vector<8x8xf32>
    %200 = arith.addf %196, %199 : vector<8x8xf32>
    %c29 = arith.constant 29 : index
    %201 = memref.load %arg2[%c29] : memref<144xf32, #tpu.memory_space<smem>>
    %202 = vector.broadcast %201 : f32 to vector<8x8xf32>
    %203 = arith.mulf %202, %59 : vector<8x8xf32>
    %204 = arith.addf %200, %203 : vector<8x8xf32>
    %c30 = arith.constant 30 : index
    %205 = memref.load %arg2[%c30] : memref<144xf32, #tpu.memory_space<smem>>
    %206 = vector.broadcast %205 : f32 to vector<8x8xf32>
    %207 = arith.mulf %206, %63 : vector<8x8xf32>
    %208 = arith.addf %204, %207 : vector<8x8xf32>
    %c31 = arith.constant 31 : index
    %209 = memref.load %arg2[%c31] : memref<144xf32, #tpu.memory_space<smem>>
    %210 = vector.broadcast %209 : f32 to vector<8x8xf32>
    %211 = arith.mulf %210, %67 : vector<8x8xf32>
    %212 = arith.addf %208, %211 : vector<8x8xf32>
    %c32 = arith.constant 32 : index
    %213 = memref.load %arg2[%c32] : memref<144xf32, #tpu.memory_space<smem>>
    %214 = vector.broadcast %213 : f32 to vector<8x8xf32>
    %215 = arith.mulf %214, %71 : vector<8x8xf32>
    %216 = arith.addf %212, %215 : vector<8x8xf32>
    %c33 = arith.constant 33 : index
    %217 = memref.load %arg2[%c33] : memref<144xf32, #tpu.memory_space<smem>>
    %218 = vector.broadcast %217 : f32 to vector<8x8xf32>
    %219 = arith.mulf %218, %75 : vector<8x8xf32>
    %220 = arith.addf %216, %219 : vector<8x8xf32>
    %c34 = arith.constant 34 : index
    %221 = memref.load %arg2[%c34] : memref<144xf32, #tpu.memory_space<smem>>
    %222 = vector.broadcast %221 : f32 to vector<8x8xf32>
    %223 = arith.mulf %222, %79 : vector<8x8xf32>
    %224 = arith.addf %220, %223 : vector<8x8xf32>
    %c35 = arith.constant 35 : index
    %225 = memref.load %arg2[%c35] : memref<144xf32, #tpu.memory_space<smem>>
    %226 = vector.broadcast %225 : f32 to vector<8x8xf32>
    %227 = arith.mulf %226, %83 : vector<8x8xf32>
    %228 = arith.addf %224, %227 : vector<8x8xf32>
    %c0_96 = arith.constant 0 : index
    %229 = memref.load %arg3[%c0_96] : memref<4xf32, #tpu.memory_space<smem>>
    %230 = vector.broadcast %229 : f32 to vector<8x8xf32>
    %231 = arith.addf %228, %230 : vector<8x8xf32>
    %cst_97 = arith.constant 0.000000e+00 : f32
    %232 = vector.broadcast %cst_97 : f32 to vector<8x8xf32>
    %233 = arith.cmpf oge, %231, %232 : vector<8x8xf32>
    %cst_98 = arith.constant 0.00999999977 : f32
    %234 = vector.broadcast %cst_98 : f32 to vector<8x8xf32>
    %235 = arith.mulf %234, %231 : vector<8x8xf32>
    %236 = arith.select %233, %231, %235 : vector<8x8xi1>, vector<8x8xf32>
    %c0_99 = arith.constant 0 : index
    %c0_100 = arith.constant 0 : index
    %c0_101 = arith.constant 0 : index
    %c0_102 = arith.constant 0 : index
    %237 = vector.load %arg5[%c0_99, %c0_100, %c0_101, %c0_102] : memref<1x4x8x8xf32, #tpu.memory_space<vmem>>, vector<1x1x8x8xf32>
    %238 = vector.shape_cast %237 : vector<1x1x8x8xf32> to vector<8x8xf32>
    %239 = vector.shape_cast %236 : vector<8x8xf32> to vector<1x1x8x8xf32>
    tpu.vector_store %arg5[%c0_99, %c0_100, %c0_101, %c0_102], %239 {strides = array<i32>} : memref<1x4x8x8xf32, #tpu.memory_space<vmem>>, vector<1x1x8x8xf32>,
    %cst_103 = arith.constant 0.000000e+00 : f32
    %240 = vector.broadcast %cst_103 : f32 to vector<8x8xf32>
    %c36 = arith.constant 36 : index
    %241 = memref.load %arg2[%c36] : memref<144xf32, #tpu.memory_space<smem>>
    %242 = vector.broadcast %241 : f32 to vector<8x8xf32>
    %243 = arith.mulf %242, %48 : vector<8x8xf32>
    %244 = arith.addf %240, %243 : vector<8x8xf32>
    %c37 = arith.constant 37 : index
    %245 = memref.load %arg2[%c37] : memref<144xf32, #tpu.memory_space<smem>>
    %246 = vector.broadcast %245 : f32 to vector<8x8xf32>
    %247 = arith.mulf %246, %52 : vector<8x8xf32>
    %248 = arith.addf %244, %247 : vector<8x8xf32>
    %c38 = arith.constant 38 : index
    %249 = memref.load %arg2[%c38] : memref<144xf32, #tpu.memory_space<smem>>
    %250 = vector.broadcast %249 : f32 to vector<8x8xf32>
    %251 = arith.mulf %250, %56 : vector<8x8xf32>
    %252 = arith.addf %248, %251 : vector<8x8xf32>
    %c39 = arith.constant 39 : index
    %253 = memref.load %arg2[%c39] : memref<144xf32, #tpu.memory_space<smem>>
    %254 = vector.broadcast %253 : f32 to vector<8x8xf32>
    %255 = arith.mulf %254, %60 : vector<8x8xf32>
    %256 = arith.addf %252, %255 : vector<8x8xf32>
    %c40 = arith.constant 40 : index
    %257 = memref.load %arg2[%c40] : memref<144xf32, #tpu.memory_space<smem>>
    %258 = vector.broadcast %257 : f32 to vector<8x8xf32>
    %259 = arith.mulf %258, %64 : vector<8x8xf32>
    %260 = arith.addf %256, %259 : vector<8x8xf32>
    %c41 = arith.constant 41 : index
    %261 = memref.load %arg2[%c41] : memref<144xf32, #tpu.memory_space<smem>>
    %262 = vector.broadcast %261 : f32 to vector<8x8xf32>
    %263 = arith.mulf %262, %68 : vector<8x8xf32>
    %264 = arith.addf %260, %263 : vector<8x8xf32>
    %c42 = arith.constant 42 : index
    %265 = memref.load %arg2[%c42] : memref<144xf32, #tpu.memory_space<smem>>
    %266 = vector.broadcast %265 : f32 to vector<8x8xf32>
    %267 = arith.mulf %266, %72 : vector<8x8xf32>
    %268 = arith.addf %264, %267 : vector<8x8xf32>
    %c43 = arith.constant 43 : index
    %269 = memref.load %arg2[%c43] : memref<144xf32, #tpu.memory_space<smem>>
    %270 = vector.broadcast %269 : f32 to vector<8x8xf32>
    %271 = arith.mulf %270, %76 : vector<8x8xf32>
    %272 = arith.addf %268, %271 : vector<8x8xf32>
    %c44 = arith.constant 44 : index
    %273 = memref.load %arg2[%c44] : memref<144xf32, #tpu.memory_space<smem>>
    %274 = vector.broadcast %273 : f32 to vector<8x8xf32>
    %275 = arith.mulf %274, %80 : vector<8x8xf32>
    %276 = arith.addf %272, %275 : vector<8x8xf32>
    %c45 = arith.constant 45 : index
    %277 = memref.load %arg2[%c45] : memref<144xf32, #tpu.memory_space<smem>>
    %278 = vector.broadcast %277 : f32 to vector<8x8xf32>
    %279 = arith.mulf %278, %49 : vector<8x8xf32>
    %280 = arith.addf %276, %279 : vector<8x8xf32>
    %c46 = arith.constant 46 : index
    %281 = memref.load %arg2[%c46] : memref<144xf32, #tpu.memory_space<smem>>
    %282 = vector.broadcast %281 : f32 to vector<8x8xf32>
    %283 = arith.mulf %282, %53 : vector<8x8xf32>
    %284 = arith.addf %280, %283 : vector<8x8xf32>
    %c47 = arith.constant 47 : index
    %285 = memref.load %arg2[%c47] : memref<144xf32, #tpu.memory_space<smem>>
    %286 = vector.broadcast %285 : f32 to vector<8x8xf32>
    %287 = arith.mulf %286, %57 : vector<8x8xf32>
    %288 = arith.addf %284, %287 : vector<8x8xf32>
    %c48 = arith.constant 48 : index
    %289 = memref.load %arg2[%c48] : memref<144xf32, #tpu.memory_space<smem>>
    %290 = vector.broadcast %289 : f32 to vector<8x8xf32>
    %291 = arith.mulf %290, %61 : vector<8x8xf32>
    %292 = arith.addf %288, %291 : vector<8x8xf32>
    %c49 = arith.constant 49 : index
    %293 = memref.load %arg2[%c49] : memref<144xf32, #tpu.memory_space<smem>>
    %294 = vector.broadcast %293 : f32 to vector<8x8xf32>
    %295 = arith.mulf %294, %65 : vector<8x8xf32>
    %296 = arith.addf %292, %295 : vector<8x8xf32>
    %c50 = arith.constant 50 : index
    %297 = memref.load %arg2[%c50] : memref<144xf32, #tpu.memory_space<smem>>
    %298 = vector.broadcast %297 : f32 to vector<8x8xf32>
    %299 = arith.mulf %298, %69 : vector<8x8xf32>
    %300 = arith.addf %296, %299 : vector<8x8xf32>
    %c51 = arith.constant 51 : index
    %301 = memref.load %arg2[%c51] : memref<144xf32, #tpu.memory_space<smem>>
    %302 = vector.broadcast %301 : f32 to vector<8x8xf32>
    %303 = arith.mulf %302, %73 : vector<8x8xf32>
    %304 = arith.addf %300, %303 : vector<8x8xf32>
    %c52 = arith.constant 52 : index
    %305 = memref.load %arg2[%c52] : memref<144xf32, #tpu.memory_space<smem>>
    %306 = vector.broadcast %305 : f32 to vector<8x8xf32>
    %307 = arith.mulf %306, %77 : vector<8x8xf32>
    %308 = arith.addf %304, %307 : vector<8x8xf32>
    %c53 = arith.constant 53 : index
    %309 = memref.load %arg2[%c53] : memref<144xf32, #tpu.memory_space<smem>>
    %310 = vector.broadcast %309 : f32 to vector<8x8xf32>
    %311 = arith.mulf %310, %81 : vector<8x8xf32>
    %312 = arith.addf %308, %311 : vector<8x8xf32>
    %c54 = arith.constant 54 : index
    %313 = memref.load %arg2[%c54] : memref<144xf32, #tpu.memory_space<smem>>
    %314 = vector.broadcast %313 : f32 to vector<8x8xf32>
    %315 = arith.mulf %314, %50 : vector<8x8xf32>
    %316 = arith.addf %312, %315 : vector<8x8xf32>
    %c55 = arith.constant 55 : index
    %317 = memref.load %arg2[%c55] : memref<144xf32, #tpu.memory_space<smem>>
    %318 = vector.broadcast %317 : f32 to vector<8x8xf32>
    %319 = arith.mulf %318, %54 : vector<8x8xf32>
    %320 = arith.addf %316, %319 : vector<8x8xf32>
    %c56 = arith.constant 56 : index
    %321 = memref.load %arg2[%c56] : memref<144xf32, #tpu.memory_space<smem>>
    %322 = vector.broadcast %321 : f32 to vector<8x8xf32>
    %323 = arith.mulf %322, %58 : vector<8x8xf32>
    %324 = arith.addf %320, %323 : vector<8x8xf32>
    %c57 = arith.constant 57 : index
    %325 = memref.load %arg2[%c57] : memref<144xf32, #tpu.memory_space<smem>>
    %326 = vector.broadcast %325 : f32 to vector<8x8xf32>
    %327 = arith.mulf %326, %62 : vector<8x8xf32>
    %328 = arith.addf %324, %327 : vector<8x8xf32>
    %c58 = arith.constant 58 : index
    %329 = memref.load %arg2[%c58] : memref<144xf32, #tpu.memory_space<smem>>
    %330 = vector.broadcast %329 : f32 to vector<8x8xf32>
    %331 = arith.mulf %330, %66 : vector<8x8xf32>
    %332 = arith.addf %328, %331 : vector<8x8xf32>
    %c59 = arith.constant 59 : index
    %333 = memref.load %arg2[%c59] : memref<144xf32, #tpu.memory_space<smem>>
    %334 = vector.broadcast %333 : f32 to vector<8x8xf32>
    %335 = arith.mulf %334, %70 : vector<8x8xf32>
    %336 = arith.addf %332, %335 : vector<8x8xf32>
    %c60 = arith.constant 60 : index
    %337 = memref.load %arg2[%c60] : memref<144xf32, #tpu.memory_space<smem>>
    %338 = vector.broadcast %337 : f32 to vector<8x8xf32>
    %339 = arith.mulf %338, %74 : vector<8x8xf32>
    %340 = arith.addf %336, %339 : vector<8x8xf32>
    %c61 = arith.constant 61 : index
    %341 = memref.load %arg2[%c61] : memref<144xf32, #tpu.memory_space<smem>>
    %342 = vector.broadcast %341 : f32 to vector<8x8xf32>
    %343 = arith.mulf %342, %78 : vector<8x8xf32>
    %344 = arith.addf %340, %343 : vector<8x8xf32>
    %c62 = arith.constant 62 : index
    %345 = memref.load %arg2[%c62] : memref<144xf32, #tpu.memory_space<smem>>
    %346 = vector.broadcast %345 : f32 to vector<8x8xf32>
    %347 = arith.mulf %346, %82 : vector<8x8xf32>
    %348 = arith.addf %344, %347 : vector<8x8xf32>
    %c63 = arith.constant 63 : index
    %349 = memref.load %arg2[%c63] : memref<144xf32, #tpu.memory_space<smem>>
    %350 = vector.broadcast %349 : f32 to vector<8x8xf32>
    %351 = arith.mulf %350, %51 : vector<8x8xf32>
    %352 = arith.addf %348, %351 : vector<8x8xf32>
    %c64 = arith.constant 64 : index
    %353 = memref.load %arg2[%c64] : memref<144xf32, #tpu.memory_space<smem>>
    %354 = vector.broadcast %353 : f32 to vector<8x8xf32>
    %355 = arith.mulf %354, %55 : vector<8x8xf32>
    %356 = arith.addf %352, %355 : vector<8x8xf32>
    %c65 = arith.constant 65 : index
    %357 = memref.load %arg2[%c65] : memref<144xf32, #tpu.memory_space<smem>>
    %358 = vector.broadcast %357 : f32 to vector<8x8xf32>
    %359 = arith.mulf %358, %59 : vector<8x8xf32>
    %360 = arith.addf %356, %359 : vector<8x8xf32>
    %c66 = arith.constant 66 : index
    %361 = memref.load %arg2[%c66] : memref<144xf32, #tpu.memory_space<smem>>
    %362 = vector.broadcast %361 : f32 to vector<8x8xf32>
    %363 = arith.mulf %362, %63 : vector<8x8xf32>
    %364 = arith.addf %360, %363 : vector<8x8xf32>
    %c67 = arith.constant 67 : index
    %365 = memref.load %arg2[%c67] : memref<144xf32, #tpu.memory_space<smem>>
    %366 = vector.broadcast %365 : f32 to vector<8x8xf32>
    %367 = arith.mulf %366, %67 : vector<8x8xf32>
    %368 = arith.addf %364, %367 : vector<8x8xf32>
    %c68 = arith.constant 68 : index
    %369 = memref.load %arg2[%c68] : memref<144xf32, #tpu.memory_space<smem>>
    %370 = vector.broadcast %369 : f32 to vector<8x8xf32>
    %371 = arith.mulf %370, %71 : vector<8x8xf32>
    %372 = arith.addf %368, %371 : vector<8x8xf32>
    %c69 = arith.constant 69 : index
    %373 = memref.load %arg2[%c69] : memref<144xf32, #tpu.memory_space<smem>>
    %374 = vector.broadcast %373 : f32 to vector<8x8xf32>
    %375 = arith.mulf %374, %75 : vector<8x8xf32>
    %376 = arith.addf %372, %375 : vector<8x8xf32>
    %c70 = arith.constant 70 : index
    %377 = memref.load %arg2[%c70] : memref<144xf32, #tpu.memory_space<smem>>
    %378 = vector.broadcast %377 : f32 to vector<8x8xf32>
    %379 = arith.mulf %378, %79 : vector<8x8xf32>
    %380 = arith.addf %376, %379 : vector<8x8xf32>
    %c71 = arith.constant 71 : index
    %381 = memref.load %arg2[%c71] : memref<144xf32, #tpu.memory_space<smem>>
    %382 = vector.broadcast %381 : f32 to vector<8x8xf32>
    %383 = arith.mulf %382, %83 : vector<8x8xf32>
    %384 = arith.addf %380, %383 : vector<8x8xf32>
    %c1_104 = arith.constant 1 : index
    %385 = memref.load %arg3[%c1_104] : memref<4xf32, #tpu.memory_space<smem>>
    %386 = vector.broadcast %385 : f32 to vector<8x8xf32>
    %387 = arith.addf %384, %386 : vector<8x8xf32>
    %cst_105 = arith.constant 0.000000e+00 : f32
    %388 = vector.broadcast %cst_105 : f32 to vector<8x8xf32>
    %389 = arith.cmpf oge, %387, %388 : vector<8x8xf32>
    %cst_106 = arith.constant 0.00999999977 : f32
    %390 = vector.broadcast %cst_106 : f32 to vector<8x8xf32>
    %391 = arith.mulf %390, %387 : vector<8x8xf32>
    %392 = arith.select %389, %387, %391 : vector<8x8xi1>, vector<8x8xf32>
    %c0_107 = arith.constant 0 : index
    %c1_108 = arith.constant 1 : index
    %c0_109 = arith.constant 0 : index
    %c0_110 = arith.constant 0 : index
    %393 = vector.load %arg5[%c0_107, %c1_108, %c0_109, %c0_110] : memref<1x4x8x8xf32, #tpu.memory_space<vmem>>, vector<1x1x8x8xf32>
    %394 = vector.shape_cast %393 : vector<1x1x8x8xf32> to vector<8x8xf32>
    %395 = vector.shape_cast %392 : vector<8x8xf32> to vector<1x1x8x8xf32>
    tpu.vector_store %arg5[%c0_107, %c1_108, %c0_109, %c0_110], %395 {strides = array<i32>} : memref<1x4x8x8xf32, #tpu.memory_space<vmem>>, vector<1x1x8x8xf32>,
    %cst_111 = arith.constant 0.000000e+00 : f32
    %396 = vector.broadcast %cst_111 : f32 to vector<8x8xf32>
    %c72 = arith.constant 72 : index
    %397 = memref.load %arg2[%c72] : memref<144xf32, #tpu.memory_space<smem>>
    %398 = vector.broadcast %397 : f32 to vector<8x8xf32>
    %399 = arith.mulf %398, %48 : vector<8x8xf32>
    %400 = arith.addf %396, %399 : vector<8x8xf32>
    %c73 = arith.constant 73 : index
    %401 = memref.load %arg2[%c73] : memref<144xf32, #tpu.memory_space<smem>>
    %402 = vector.broadcast %401 : f32 to vector<8x8xf32>
    %403 = arith.mulf %402, %52 : vector<8x8xf32>
    %404 = arith.addf %400, %403 : vector<8x8xf32>
    %c74 = arith.constant 74 : index
    %405 = memref.load %arg2[%c74] : memref<144xf32, #tpu.memory_space<smem>>
    %406 = vector.broadcast %405 : f32 to vector<8x8xf32>
    %407 = arith.mulf %406, %56 : vector<8x8xf32>
    %408 = arith.addf %404, %407 : vector<8x8xf32>
    %c75 = arith.constant 75 : index
    %409 = memref.load %arg2[%c75] : memref<144xf32, #tpu.memory_space<smem>>
    %410 = vector.broadcast %409 : f32 to vector<8x8xf32>
    %411 = arith.mulf %410, %60 : vector<8x8xf32>
    %412 = arith.addf %408, %411 : vector<8x8xf32>
    %c76 = arith.constant 76 : index
    %413 = memref.load %arg2[%c76] : memref<144xf32, #tpu.memory_space<smem>>
    %414 = vector.broadcast %413 : f32 to vector<8x8xf32>
    %415 = arith.mulf %414, %64 : vector<8x8xf32>
    %416 = arith.addf %412, %415 : vector<8x8xf32>
    %c77 = arith.constant 77 : index
    %417 = memref.load %arg2[%c77] : memref<144xf32, #tpu.memory_space<smem>>
    %418 = vector.broadcast %417 : f32 to vector<8x8xf32>
    %419 = arith.mulf %418, %68 : vector<8x8xf32>
    %420 = arith.addf %416, %419 : vector<8x8xf32>
    %c78 = arith.constant 78 : index
    %421 = memref.load %arg2[%c78] : memref<144xf32, #tpu.memory_space<smem>>
    %422 = vector.broadcast %421 : f32 to vector<8x8xf32>
    %423 = arith.mulf %422, %72 : vector<8x8xf32>
    %424 = arith.addf %420, %423 : vector<8x8xf32>
    %c79 = arith.constant 79 : index
    %425 = memref.load %arg2[%c79] : memref<144xf32, #tpu.memory_space<smem>>
    %426 = vector.broadcast %425 : f32 to vector<8x8xf32>
    %427 = arith.mulf %426, %76 : vector<8x8xf32>
    %428 = arith.addf %424, %427 : vector<8x8xf32>
    %c80 = arith.constant 80 : index
    %429 = memref.load %arg2[%c80] : memref<144xf32, #tpu.memory_space<smem>>
    %430 = vector.broadcast %429 : f32 to vector<8x8xf32>
    %431 = arith.mulf %430, %80 : vector<8x8xf32>
    %432 = arith.addf %428, %431 : vector<8x8xf32>
    %c81 = arith.constant 81 : index
    %433 = memref.load %arg2[%c81] : memref<144xf32, #tpu.memory_space<smem>>
    %434 = vector.broadcast %433 : f32 to vector<8x8xf32>
    %435 = arith.mulf %434, %49 : vector<8x8xf32>
    %436 = arith.addf %432, %435 : vector<8x8xf32>
    %c82 = arith.constant 82 : index
    %437 = memref.load %arg2[%c82] : memref<144xf32, #tpu.memory_space<smem>>
    %438 = vector.broadcast %437 : f32 to vector<8x8xf32>
    %439 = arith.mulf %438, %53 : vector<8x8xf32>
    %440 = arith.addf %436, %439 : vector<8x8xf32>
    %c83 = arith.constant 83 : index
    %441 = memref.load %arg2[%c83] : memref<144xf32, #tpu.memory_space<smem>>
    %442 = vector.broadcast %441 : f32 to vector<8x8xf32>
    %443 = arith.mulf %442, %57 : vector<8x8xf32>
    %444 = arith.addf %440, %443 : vector<8x8xf32>
    %c84 = arith.constant 84 : index
    %445 = memref.load %arg2[%c84] : memref<144xf32, #tpu.memory_space<smem>>
    %446 = vector.broadcast %445 : f32 to vector<8x8xf32>
    %447 = arith.mulf %446, %61 : vector<8x8xf32>
    %448 = arith.addf %444, %447 : vector<8x8xf32>
    %c85 = arith.constant 85 : index
    %449 = memref.load %arg2[%c85] : memref<144xf32, #tpu.memory_space<smem>>
    %450 = vector.broadcast %449 : f32 to vector<8x8xf32>
    %451 = arith.mulf %450, %65 : vector<8x8xf32>
    %452 = arith.addf %448, %451 : vector<8x8xf32>
    %c86 = arith.constant 86 : index
    %453 = memref.load %arg2[%c86] : memref<144xf32, #tpu.memory_space<smem>>
    %454 = vector.broadcast %453 : f32 to vector<8x8xf32>
    %455 = arith.mulf %454, %69 : vector<8x8xf32>
    %456 = arith.addf %452, %455 : vector<8x8xf32>
    %c87 = arith.constant 87 : index
    %457 = memref.load %arg2[%c87] : memref<144xf32, #tpu.memory_space<smem>>
    %458 = vector.broadcast %457 : f32 to vector<8x8xf32>
    %459 = arith.mulf %458, %73 : vector<8x8xf32>
    %460 = arith.addf %456, %459 : vector<8x8xf32>
    %c88 = arith.constant 88 : index
    %461 = memref.load %arg2[%c88] : memref<144xf32, #tpu.memory_space<smem>>
    %462 = vector.broadcast %461 : f32 to vector<8x8xf32>
    %463 = arith.mulf %462, %77 : vector<8x8xf32>
    %464 = arith.addf %460, %463 : vector<8x8xf32>
    %c89 = arith.constant 89 : index
    %465 = memref.load %arg2[%c89] : memref<144xf32, #tpu.memory_space<smem>>
    %466 = vector.broadcast %465 : f32 to vector<8x8xf32>
    %467 = arith.mulf %466, %81 : vector<8x8xf32>
    %468 = arith.addf %464, %467 : vector<8x8xf32>
    %c90 = arith.constant 90 : index
    %469 = memref.load %arg2[%c90] : memref<144xf32, #tpu.memory_space<smem>>
    %470 = vector.broadcast %469 : f32 to vector<8x8xf32>
    %471 = arith.mulf %470, %50 : vector<8x8xf32>
    %472 = arith.addf %468, %471 : vector<8x8xf32>
    %c91 = arith.constant 91 : index
    %473 = memref.load %arg2[%c91] : memref<144xf32, #tpu.memory_space<smem>>
    %474 = vector.broadcast %473 : f32 to vector<8x8xf32>
    %475 = arith.mulf %474, %54 : vector<8x8xf32>
    %476 = arith.addf %472, %475 : vector<8x8xf32>
    %c92 = arith.constant 92 : index
    %477 = memref.load %arg2[%c92] : memref<144xf32, #tpu.memory_space<smem>>
    %478 = vector.broadcast %477 : f32 to vector<8x8xf32>
    %479 = arith.mulf %478, %58 : vector<8x8xf32>
    %480 = arith.addf %476, %479 : vector<8x8xf32>
    %c93 = arith.constant 93 : index
    %481 = memref.load %arg2[%c93] : memref<144xf32, #tpu.memory_space<smem>>
    %482 = vector.broadcast %481 : f32 to vector<8x8xf32>
    %483 = arith.mulf %482, %62 : vector<8x8xf32>
    %484 = arith.addf %480, %483 : vector<8x8xf32>
    %c94 = arith.constant 94 : index
    %485 = memref.load %arg2[%c94] : memref<144xf32, #tpu.memory_space<smem>>
    %486 = vector.broadcast %485 : f32 to vector<8x8xf32>
    %487 = arith.mulf %486, %66 : vector<8x8xf32>
    %488 = arith.addf %484, %487 : vector<8x8xf32>
    %c95 = arith.constant 95 : index
    %489 = memref.load %arg2[%c95] : memref<144xf32, #tpu.memory_space<smem>>
    %490 = vector.broadcast %489 : f32 to vector<8x8xf32>
    %491 = arith.mulf %490, %70 : vector<8x8xf32>
    %492 = arith.addf %488, %491 : vector<8x8xf32>
    %c96 = arith.constant 96 : index
    %493 = memref.load %arg2[%c96] : memref<144xf32, #tpu.memory_space<smem>>
    %494 = vector.broadcast %493 : f32 to vector<8x8xf32>
    %495 = arith.mulf %494, %74 : vector<8x8xf32>
    %496 = arith.addf %492, %495 : vector<8x8xf32>
    %c97 = arith.constant 97 : index
    %497 = memref.load %arg2[%c97] : memref<144xf32, #tpu.memory_space<smem>>
    %498 = vector.broadcast %497 : f32 to vector<8x8xf32>
    %499 = arith.mulf %498, %78 : vector<8x8xf32>
    %500 = arith.addf %496, %499 : vector<8x8xf32>
    %c98 = arith.constant 98 : index
    %501 = memref.load %arg2[%c98] : memref<144xf32, #tpu.memory_space<smem>>
    %502 = vector.broadcast %501 : f32 to vector<8x8xf32>
    %503 = arith.mulf %502, %82 : vector<8x8xf32>
    %504 = arith.addf %500, %503 : vector<8x8xf32>
    %c99 = arith.constant 99 : index
    %505 = memref.load %arg2[%c99] : memref<144xf32, #tpu.memory_space<smem>>
    %506 = vector.broadcast %505 : f32 to vector<8x8xf32>
    %507 = arith.mulf %506, %51 : vector<8x8xf32>
    %508 = arith.addf %504, %507 : vector<8x8xf32>
    %c100 = arith.constant 100 : index
    %509 = memref.load %arg2[%c100] : memref<144xf32, #tpu.memory_space<smem>>
    %510 = vector.broadcast %509 : f32 to vector<8x8xf32>
    %511 = arith.mulf %510, %55 : vector<8x8xf32>
    %512 = arith.addf %508, %511 : vector<8x8xf32>
    %c101 = arith.constant 101 : index
    %513 = memref.load %arg2[%c101] : memref<144xf32, #tpu.memory_space<smem>>
    %514 = vector.broadcast %513 : f32 to vector<8x8xf32>
    %515 = arith.mulf %514, %59 : vector<8x8xf32>
    %516 = arith.addf %512, %515 : vector<8x8xf32>
    %c102 = arith.constant 102 : index
    %517 = memref.load %arg2[%c102] : memref<144xf32, #tpu.memory_space<smem>>
    %518 = vector.broadcast %517 : f32 to vector<8x8xf32>
    %519 = arith.mulf %518, %63 : vector<8x8xf32>
    %520 = arith.addf %516, %519 : vector<8x8xf32>
    %c103 = arith.constant 103 : index
    %521 = memref.load %arg2[%c103] : memref<144xf32, #tpu.memory_space<smem>>
    %522 = vector.broadcast %521 : f32 to vector<8x8xf32>
    %523 = arith.mulf %522, %67 : vector<8x8xf32>
    %524 = arith.addf %520, %523 : vector<8x8xf32>
    %c104 = arith.constant 104 : index
    %525 = memref.load %arg2[%c104] : memref<144xf32, #tpu.memory_space<smem>>
    %526 = vector.broadcast %525 : f32 to vector<8x8xf32>
    %527 = arith.mulf %526, %71 : vector<8x8xf32>
    %528 = arith.addf %524, %527 : vector<8x8xf32>
    %c105 = arith.constant 105 : index
    %529 = memref.load %arg2[%c105] : memref<144xf32, #tpu.memory_space<smem>>
    %530 = vector.broadcast %529 : f32 to vector<8x8xf32>
    %531 = arith.mulf %530, %75 : vector<8x8xf32>
    %532 = arith.addf %528, %531 : vector<8x8xf32>
    %c106 = arith.constant 106 : index
    %533 = memref.load %arg2[%c106] : memref<144xf32, #tpu.memory_space<smem>>
    %534 = vector.broadcast %533 : f32 to vector<8x8xf32>
    %535 = arith.mulf %534, %79 : vector<8x8xf32>
    %536 = arith.addf %532, %535 : vector<8x8xf32>
    %c107 = arith.constant 107 : index
    %537 = memref.load %arg2[%c107] : memref<144xf32, #tpu.memory_space<smem>>
    %538 = vector.broadcast %537 : f32 to vector<8x8xf32>
    %539 = arith.mulf %538, %83 : vector<8x8xf32>
    %540 = arith.addf %536, %539 : vector<8x8xf32>
    %c2_112 = arith.constant 2 : index
    %541 = memref.load %arg3[%c2_112] : memref<4xf32, #tpu.memory_space<smem>>
    %542 = vector.broadcast %541 : f32 to vector<8x8xf32>
    %543 = arith.addf %540, %542 : vector<8x8xf32>
    %cst_113 = arith.constant 0.000000e+00 : f32
    %544 = vector.broadcast %cst_113 : f32 to vector<8x8xf32>
    %545 = arith.cmpf oge, %543, %544 : vector<8x8xf32>
    %cst_114 = arith.constant 0.00999999977 : f32
    %546 = vector.broadcast %cst_114 : f32 to vector<8x8xf32>
    %547 = arith.mulf %546, %543 : vector<8x8xf32>
    %548 = arith.select %545, %543, %547 : vector<8x8xi1>, vector<8x8xf32>
    %c0_115 = arith.constant 0 : index
    %c2_116 = arith.constant 2 : index
    %c0_117 = arith.constant 0 : index
    %c0_118 = arith.constant 0 : index
    %549 = vector.load %arg5[%c0_115, %c2_116, %c0_117, %c0_118] : memref<1x4x8x8xf32, #tpu.memory_space<vmem>>, vector<1x1x8x8xf32>
    %550 = vector.shape_cast %549 : vector<1x1x8x8xf32> to vector<8x8xf32>
    %551 = vector.shape_cast %548 : vector<8x8xf32> to vector<1x1x8x8xf32>
    tpu.vector_store %arg5[%c0_115, %c2_116, %c0_117, %c0_118], %551 {strides = array<i32>} : memref<1x4x8x8xf32, #tpu.memory_space<vmem>>, vector<1x1x8x8xf32>,
    %cst_119 = arith.constant 0.000000e+00 : f32
    %552 = vector.broadcast %cst_119 : f32 to vector<8x8xf32>
    %c108 = arith.constant 108 : index
    %553 = memref.load %arg2[%c108] : memref<144xf32, #tpu.memory_space<smem>>
    %554 = vector.broadcast %553 : f32 to vector<8x8xf32>
    %555 = arith.mulf %554, %48 : vector<8x8xf32>
    %556 = arith.addf %552, %555 : vector<8x8xf32>
    %c109 = arith.constant 109 : index
    %557 = memref.load %arg2[%c109] : memref<144xf32, #tpu.memory_space<smem>>
    %558 = vector.broadcast %557 : f32 to vector<8x8xf32>
    %559 = arith.mulf %558, %52 : vector<8x8xf32>
    %560 = arith.addf %556, %559 : vector<8x8xf32>
    %c110 = arith.constant 110 : index
    %561 = memref.load %arg2[%c110] : memref<144xf32, #tpu.memory_space<smem>>
    %562 = vector.broadcast %561 : f32 to vector<8x8xf32>
    %563 = arith.mulf %562, %56 : vector<8x8xf32>
    %564 = arith.addf %560, %563 : vector<8x8xf32>
    %c111 = arith.constant 111 : index
    %565 = memref.load %arg2[%c111] : memref<144xf32, #tpu.memory_space<smem>>
    %566 = vector.broadcast %565 : f32 to vector<8x8xf32>
    %567 = arith.mulf %566, %60 : vector<8x8xf32>
    %568 = arith.addf %564, %567 : vector<8x8xf32>
    %c112 = arith.constant 112 : index
    %569 = memref.load %arg2[%c112] : memref<144xf32, #tpu.memory_space<smem>>
    %570 = vector.broadcast %569 : f32 to vector<8x8xf32>
    %571 = arith.mulf %570, %64 : vector<8x8xf32>
    %572 = arith.addf %568, %571 : vector<8x8xf32>
    %c113 = arith.constant 113 : index
    %573 = memref.load %arg2[%c113] : memref<144xf32, #tpu.memory_space<smem>>
    %574 = vector.broadcast %573 : f32 to vector<8x8xf32>
    %575 = arith.mulf %574, %68 : vector<8x8xf32>
    %576 = arith.addf %572, %575 : vector<8x8xf32>
    %c114 = arith.constant 114 : index
    %577 = memref.load %arg2[%c114] : memref<144xf32, #tpu.memory_space<smem>>
    %578 = vector.broadcast %577 : f32 to vector<8x8xf32>
    %579 = arith.mulf %578, %72 : vector<8x8xf32>
    %580 = arith.addf %576, %579 : vector<8x8xf32>
    %c115 = arith.constant 115 : index
    %581 = memref.load %arg2[%c115] : memref<144xf32, #tpu.memory_space<smem>>
    %582 = vector.broadcast %581 : f32 to vector<8x8xf32>
    %583 = arith.mulf %582, %76 : vector<8x8xf32>
    %584 = arith.addf %580, %583 : vector<8x8xf32>
    %c116 = arith.constant 116 : index
    %585 = memref.load %arg2[%c116] : memref<144xf32, #tpu.memory_space<smem>>
    %586 = vector.broadcast %585 : f32 to vector<8x8xf32>
    %587 = arith.mulf %586, %80 : vector<8x8xf32>
    %588 = arith.addf %584, %587 : vector<8x8xf32>
    %c117 = arith.constant 117 : index
    %589 = memref.load %arg2[%c117] : memref<144xf32, #tpu.memory_space<smem>>
    %590 = vector.broadcast %589 : f32 to vector<8x8xf32>
    %591 = arith.mulf %590, %49 : vector<8x8xf32>
    %592 = arith.addf %588, %591 : vector<8x8xf32>
    %c118 = arith.constant 118 : index
    %593 = memref.load %arg2[%c118] : memref<144xf32, #tpu.memory_space<smem>>
    %594 = vector.broadcast %593 : f32 to vector<8x8xf32>
    %595 = arith.mulf %594, %53 : vector<8x8xf32>
    %596 = arith.addf %592, %595 : vector<8x8xf32>
    %c119 = arith.constant 119 : index
    %597 = memref.load %arg2[%c119] : memref<144xf32, #tpu.memory_space<smem>>
    %598 = vector.broadcast %597 : f32 to vector<8x8xf32>
    %599 = arith.mulf %598, %57 : vector<8x8xf32>
    %600 = arith.addf %596, %599 : vector<8x8xf32>
    %c120 = arith.constant 120 : index
    %601 = memref.load %arg2[%c120] : memref<144xf32, #tpu.memory_space<smem>>
    %602 = vector.broadcast %601 : f32 to vector<8x8xf32>
    %603 = arith.mulf %602, %61 : vector<8x8xf32>
    %604 = arith.addf %600, %603 : vector<8x8xf32>
    %c121 = arith.constant 121 : index
    %605 = memref.load %arg2[%c121] : memref<144xf32, #tpu.memory_space<smem>>
    %606 = vector.broadcast %605 : f32 to vector<8x8xf32>
    %607 = arith.mulf %606, %65 : vector<8x8xf32>
    %608 = arith.addf %604, %607 : vector<8x8xf32>
    %c122 = arith.constant 122 : index
    %609 = memref.load %arg2[%c122] : memref<144xf32, #tpu.memory_space<smem>>
    %610 = vector.broadcast %609 : f32 to vector<8x8xf32>
    %611 = arith.mulf %610, %69 : vector<8x8xf32>
    %612 = arith.addf %608, %611 : vector<8x8xf32>
    %c123 = arith.constant 123 : index
    %613 = memref.load %arg2[%c123] : memref<144xf32, #tpu.memory_space<smem>>
    %614 = vector.broadcast %613 : f32 to vector<8x8xf32>
    %615 = arith.mulf %614, %73 : vector<8x8xf32>
    %616 = arith.addf %612, %615 : vector<8x8xf32>
    %c124 = arith.constant 124 : index
    %617 = memref.load %arg2[%c124] : memref<144xf32, #tpu.memory_space<smem>>
    %618 = vector.broadcast %617 : f32 to vector<8x8xf32>
    %619 = arith.mulf %618, %77 : vector<8x8xf32>
    %620 = arith.addf %616, %619 : vector<8x8xf32>
    %c125 = arith.constant 125 : index
    %621 = memref.load %arg2[%c125] : memref<144xf32, #tpu.memory_space<smem>>
    %622 = vector.broadcast %621 : f32 to vector<8x8xf32>
    %623 = arith.mulf %622, %81 : vector<8x8xf32>
    %624 = arith.addf %620, %623 : vector<8x8xf32>
    %c126 = arith.constant 126 : index
    %625 = memref.load %arg2[%c126] : memref<144xf32, #tpu.memory_space<smem>>
    %626 = vector.broadcast %625 : f32 to vector<8x8xf32>
    %627 = arith.mulf %626, %50 : vector<8x8xf32>
    %628 = arith.addf %624, %627 : vector<8x8xf32>
    %c127 = arith.constant 127 : index
    %629 = memref.load %arg2[%c127] : memref<144xf32, #tpu.memory_space<smem>>
    %630 = vector.broadcast %629 : f32 to vector<8x8xf32>
    %631 = arith.mulf %630, %54 : vector<8x8xf32>
    %632 = arith.addf %628, %631 : vector<8x8xf32>
    %c128 = arith.constant 128 : index
    %633 = memref.load %arg2[%c128] : memref<144xf32, #tpu.memory_space<smem>>
    %634 = vector.broadcast %633 : f32 to vector<8x8xf32>
    %635 = arith.mulf %634, %58 : vector<8x8xf32>
    %636 = arith.addf %632, %635 : vector<8x8xf32>
    %c129 = arith.constant 129 : index
    %637 = memref.load %arg2[%c129] : memref<144xf32, #tpu.memory_space<smem>>
    %638 = vector.broadcast %637 : f32 to vector<8x8xf32>
    %639 = arith.mulf %638, %62 : vector<8x8xf32>
    %640 = arith.addf %636, %639 : vector<8x8xf32>
    %c130 = arith.constant 130 : index
    %641 = memref.load %arg2[%c130] : memref<144xf32, #tpu.memory_space<smem>>
    %642 = vector.broadcast %641 : f32 to vector<8x8xf32>
    %643 = arith.mulf %642, %66 : vector<8x8xf32>
    %644 = arith.addf %640, %643 : vector<8x8xf32>
    %c131 = arith.constant 131 : index
    %645 = memref.load %arg2[%c131] : memref<144xf32, #tpu.memory_space<smem>>
    %646 = vector.broadcast %645 : f32 to vector<8x8xf32>
    %647 = arith.mulf %646, %70 : vector<8x8xf32>
    %648 = arith.addf %644, %647 : vector<8x8xf32>
    %c132 = arith.constant 132 : index
    %649 = memref.load %arg2[%c132] : memref<144xf32, #tpu.memory_space<smem>>
    %650 = vector.broadcast %649 : f32 to vector<8x8xf32>
    %651 = arith.mulf %650, %74 : vector<8x8xf32>
    %652 = arith.addf %648, %651 : vector<8x8xf32>
    %c133 = arith.constant 133 : index
    %653 = memref.load %arg2[%c133] : memref<144xf32, #tpu.memory_space<smem>>
    %654 = vector.broadcast %653 : f32 to vector<8x8xf32>
    %655 = arith.mulf %654, %78 : vector<8x8xf32>
    %656 = arith.addf %652, %655 : vector<8x8xf32>
    %c134 = arith.constant 134 : index
    %657 = memref.load %arg2[%c134] : memref<144xf32, #tpu.memory_space<smem>>
    %658 = vector.broadcast %657 : f32 to vector<8x8xf32>
    %659 = arith.mulf %658, %82 : vector<8x8xf32>
    %660 = arith.addf %656, %659 : vector<8x8xf32>
    %c135 = arith.constant 135 : index
    %661 = memref.load %arg2[%c135] : memref<144xf32, #tpu.memory_space<smem>>
    %662 = vector.broadcast %661 : f32 to vector<8x8xf32>
    %663 = arith.mulf %662, %51 : vector<8x8xf32>
    %664 = arith.addf %660, %663 : vector<8x8xf32>
    %c136 = arith.constant 136 : index
    %665 = memref.load %arg2[%c136] : memref<144xf32, #tpu.memory_space<smem>>
    %666 = vector.broadcast %665 : f32 to vector<8x8xf32>
    %667 = arith.mulf %666, %55 : vector<8x8xf32>
    %668 = arith.addf %664, %667 : vector<8x8xf32>
    %c137 = arith.constant 137 : index
    %669 = memref.load %arg2[%c137] : memref<144xf32, #tpu.memory_space<smem>>
    %670 = vector.broadcast %669 : f32 to vector<8x8xf32>
    %671 = arith.mulf %670, %59 : vector<8x8xf32>
    %672 = arith.addf %668, %671 : vector<8x8xf32>
    %c138 = arith.constant 138 : index
    %673 = memref.load %arg2[%c138] : memref<144xf32, #tpu.memory_space<smem>>
    %674 = vector.broadcast %673 : f32 to vector<8x8xf32>
    %675 = arith.mulf %674, %63 : vector<8x8xf32>
    %676 = arith.addf %672, %675 : vector<8x8xf32>
    %c139 = arith.constant 139 : index
    %677 = memref.load %arg2[%c139] : memref<144xf32, #tpu.memory_space<smem>>
    %678 = vector.broadcast %677 : f32 to vector<8x8xf32>
    %679 = arith.mulf %678, %67 : vector<8x8xf32>
    %680 = arith.addf %676, %679 : vector<8x8xf32>
    %c140 = arith.constant 140 : index
    %681 = memref.load %arg2[%c140] : memref<144xf32, #tpu.memory_space<smem>>
    %682 = vector.broadcast %681 : f32 to vector<8x8xf32>
    %683 = arith.mulf %682, %71 : vector<8x8xf32>
    %684 = arith.addf %680, %683 : vector<8x8xf32>
    %c141 = arith.constant 141 : index
    %685 = memref.load %arg2[%c141] : memref<144xf32, #tpu.memory_space<smem>>
    %686 = vector.broadcast %685 : f32 to vector<8x8xf32>
    %687 = arith.mulf %686, %75 : vector<8x8xf32>
    %688 = arith.addf %684, %687 : vector<8x8xf32>
    %c142 = arith.constant 142 : index
    %689 = memref.load %arg2[%c142] : memref<144xf32, #tpu.memory_space<smem>>
    %690 = vector.broadcast %689 : f32 to vector<8x8xf32>
    %691 = arith.mulf %690, %79 : vector<8x8xf32>
    %692 = arith.addf %688, %691 : vector<8x8xf32>
    %c143 = arith.constant 143 : index
    %693 = memref.load %arg2[%c143] : memref<144xf32, #tpu.memory_space<smem>>
    %694 = vector.broadcast %693 : f32 to vector<8x8xf32>
    %695 = arith.mulf %694, %83 : vector<8x8xf32>
    %696 = arith.addf %692, %695 : vector<8x8xf32>
    %c3_120 = arith.constant 3 : index
    %697 = memref.load %arg3[%c3_120] : memref<4xf32, #tpu.memory_space<smem>>
    %698 = vector.broadcast %697 : f32 to vector<8x8xf32>
    %699 = arith.addf %696, %698 : vector<8x8xf32>
    %cst_121 = arith.constant 0.000000e+00 : f32
    %700 = vector.broadcast %cst_121 : f32 to vector<8x8xf32>
    %701 = arith.cmpf oge, %699, %700 : vector<8x8xf32>
    %cst_122 = arith.constant 0.00999999977 : f32
    %702 = vector.broadcast %cst_122 : f32 to vector<8x8xf32>
    %703 = arith.mulf %702, %699 : vector<8x8xf32>
    %704 = arith.select %701, %699, %703 : vector<8x8xi1>, vector<8x8xf32>
    %c0_123 = arith.constant 0 : index
    %c3_124 = arith.constant 3 : index
    %c0_125 = arith.constant 0 : index
    %c0_126 = arith.constant 0 : index
    %705 = vector.load %arg5[%c0_123, %c3_124, %c0_125, %c0_126] : memref<1x4x8x8xf32, #tpu.memory_space<vmem>>, vector<1x1x8x8xf32>
    %706 = vector.shape_cast %705 : vector<1x1x8x8xf32> to vector<8x8xf32>
    %707 = vector.shape_cast %704 : vector<8x8xf32> to vector<1x1x8x8xf32>
    tpu.vector_store %arg5[%c0_123, %c3_124, %c0_125, %c0_126], %707 {strides = array<i32>} : memref<1x4x8x8xf32, #tpu.memory_space<vmem>>, vector<1x1x8x8xf32>,
    return
  }
  func.func @transform_0(%arg0: i32, %arg1: i32) -> i32 {
    %c0_i32 = arith.constant 0 : i32
    %c0_i32_0 = arith.constant 0 : i32
    return %c0_i32 : i32
  }
  func.func @transform_1(%arg0: i32, %arg1: i32) -> i32 {
    %c0_i32 = arith.constant 0 : i32
    %c0_i32_0 = arith.constant 0 : i32
    return %c0_i32 : i32
  }
  func.func @transform_2(%arg0: i32, %arg1: i32) -> (i32, i32, i32, i32) {
    %c0_i32 = arith.constant 0 : i32
    %c0_i32_0 = arith.constant 0 : i32
    %c0_i32_1 = arith.constant 0 : i32
    return %arg0, %c0_i32, %arg1, %c0_i32_0 : i32, i32, i32, i32
  }
  func.func @transform_3(%arg0: i32, %arg1: i32) -> (i32, i32, i32, i32) {
    %c0_i32 = arith.constant 0 : i32
    %c0_i32_0 = arith.constant 0 : i32
    %c0_i32_1 = arith.constant 0 : i32
    return %arg0, %c0_i32, %arg1, %c0_i32_0 : i32, i32, i32, i32
  }
}

</mosaic_0001>

<llo_original>
// kernel: downsampling_forward.1
$region0: #{downsampling_forward.1}
  #allocation0 [shape = 'u32[]', space=smem, size = 0x4, offset = 0x4, fixed_abs, tag = 'smem constant byte address 0x4 - core index']
  #allocation1 [shape = 'u32[144,128]{1,0:T(1,128)}', space=vmem, size = 0x12000, scoped, tag = 'internal scratch']
  %s0 = inlined_call_operand.vmem [shape: f32[144], index: 0, kind: input, shape index: {}]
  %s1 = inlined_call_operand.vmem [shape: f32[4], index: 1, kind: input, shape index: {}]
  %s2 = inlined_call_operand.vmem [shape: f32[2,24,8,9], index: 2, kind: input, shape index: {}]
  %s3 = inlined_call_operand.hbm [shape: f32[2,4,8,8], index: 3, kind: output, shape index: {}]
  %s4 = sld [smem:[#allocation0]]
  $region53: #{downsampling_forward.1} parent=0
    _
  %s6 = ssub.s32 1, %s4
  %s7 = scalar_select 0, %s6, %s4
  $region1: #{downsampling_forward.1} parent=0
    #allocation2 [shape = 'u8[1024]{0}', space=smem, size = 0x400, scoped, tag = 'input window, operand 0, single buffered']
    #allocation3 [shape = 's32[2]{0}', space=sflag, size = 0x8, scoped, tag = 'scoped memory for downsampling_forward.1']
    #allocation4 [shape = 's32[2]{0}', space=sflag, size = 0x8, scoped, tag = 'scoped memory for downsampling_forward.1']
    #allocation5 [shape = 'u8[512]{0}', space=smem, size = 0x200, scoped, tag = 'input window, operand 1, single buffered']
    #allocation6 [shape = 's32[1]{0}', space=sflag, size = 0x4, scoped, tag = 'scoped memory for downsampling_forward.1']
    #allocation7 [shape = 'u8[32768]{0}', space=vmem, size = 0x8000, scoped, tag = 'output window, operand 0']
    %8 = vsyncpa [#allocation4], 0
    %9 = vsyncpa [#allocation6], 0
    %10 = vsyncpa [#allocation3], 0
    %s11 = scalar_lea.sflag [#allocation3], 1
    %12 = vsyncpa %s11, 0
    loop: start=0, step=1, limit=4
    $region2: #{downsampling_forward.1} parent=1 // loop_pre_header
      _
    $region3: #{downsampling_forward.1} parent=1 // loop_header
      %s14 = sphi 0, %s18
      %p15 = scmp.ge.s32.totalorder %s14, 4
      %s21 = sphi 0, %s33
      %s22 = sphi 0, %s29
      %s23 = sphi 0, %s21
      %s24 = sphi 0, %s22
      %s25 = sphi 0, %s23
      %s26 = sphi 0, %s24
      %s34 = sphi 0, %s34
      %s36 = sphi 0, %s34
      %s37 = sphi 0, %s36
      %s51 = sphi 0, %s37
      %s55 = sphi 0, %s55
      %s57 = sphi 0, %s55
      %s58 = sphi 0, %s57
      %s72 = sphi 0, %s58
      %s80 = sphi 0, %s82
      %s83 = sphi 0, %s80
      %s84 = sphi 0, %s83
      %s100 = sphi 0, %s84
      %s108 = sphi 0, %s110
      %s111 = sphi 0, %s108
      %s112 = sphi 0, %s111
      %s128 = sphi 0, %s112
    $region4: #{downsampling_forward.1} parent=1 // loop_header_branch
      %17 = sbr.rel (%p15) target = $region8
    $region5: #{downsampling_forward.1} parent=1 // loop_body
      %s19 = ssub.s32 %s14, 1
      %s20 = ssub.s32 %s14, 2
      %s27 = sadd.s32 1, %s22
      %p28 = scmp.ge.s32.totalorder %s27, 1
      %s29 = scalar_select %p28, 0, %s27
      %s30 = sadd.s32 1, %s21
      %s31 = scalar_select %p28, %s30, %s21
      %p32 = scmp.ge.s32.totalorder %s31, 2
      %s33 = scalar_select %p32, 0, %s31
      %s35 = sadd.s32 %s34, 1
      %p38 = scmp.eq.s32.totalorder %s14, 1
      %p39 = scmp.ne.s32.totalorder %s34, %s36
      %p40 = scmp.eq.s32.totalorder %s14, 0
      %p41 = por %p39, %p40
      %p42 = scmp.ne.s32.totalorder %s34, %s36
      %p43 = scmp.eq.s32.totalorder %s19, 1
      %p44 = por %p42, %p43
      %p45 = scmp.ne.s32.totalorder %s36, %s37
      %p46 = scmp.eq.s32.totalorder %s19, 0
      %p47 = por %p45, %p46
      %p48 = scmp.ne.s32.totalorder %s36, %s37
      %p49 = scmp.eq.s32.totalorder %s20, 1
      %p50 = por %p48, %p49
      %p52 = scmp.ne.s32.totalorder %s37, %s51
      %p53 = scmp.eq.s32.totalorder %s20, 0
      %p54 = por %p52, %p53
      %s56 = sadd.s32 %s55, 1
      %p59 = scmp.eq.s32.totalorder %s14, 1
      %p60 = scmp.ne.s32.totalorder %s55, %s57
      %p61 = scmp.eq.s32.totalorder %s14, 0
      %p62 = por %p60, %p61
      %p63 = scmp.ne.s32.totalorder %s55, %s57
      %p64 = scmp.eq.s32.totalorder %s19, 1
      %p65 = por %p63, %p64
      %p66 = scmp.ne.s32.totalorder %s57, %s58
      %p67 = scmp.eq.s32.totalorder %s19, 0
      %p68 = por %p66, %p67
      %p69 = scmp.ne.s32.totalorder %s57, %s58
      %p70 = scmp.eq.s32.totalorder %s20, 1
      %p71 = por %p69, %p70
      %p73 = scmp.ne.s32.totalorder %s58, %s72
      %p74 = scmp.eq.s32.totalorder %s20, 0
      %p75 = por %p73, %p74
      %s76 = ssub.s32 %s21, %s33
      %s77 = ssub.s32 %s22, %s29
      %s78 = sor.u32 %s76, %s77
      %p79 = scmp.eq.s32.totalorder %s78, 0
      %s81 = sadd.s32 %s80, 1
      %s82 = scalar_select %p79, %s80, %s81
      %p85 = pneg %p79
      %p86 = scmp.eq.s32.totalorder %s14, 1
      %p87 = por %p85, %p86
      %p88 = scmp.ne.s32.totalorder %s80, %s83
      %p89 = scmp.eq.s32.totalorder %s14, 0
      %p90 = por %p88, %p89
      %p91 = scmp.ne.s32.totalorder %s80, %s83
      %p92 = scmp.eq.s32.totalorder %s19, 1
      %p93 = por %p91, %p92
      %p94 = scmp.ne.s32.totalorder %s83, %s84
      %p95 = scmp.eq.s32.totalorder %s19, 0
      %p96 = por %p94, %p95
      %p97 = scmp.ne.s32.totalorder %s83, %s84
      %p98 = scmp.eq.s32.totalorder %s20, 1
      %p99 = por %p97, %p98
      %p101 = scmp.ne.s32.totalorder %s84, %s100
      %p102 = scmp.eq.s32.totalorder %s20, 0
      %p103 = por %p101, %p102
      %s104 = ssub.s32 %s21, %s33
      %s105 = ssub.s32 %s22, %s29
      %s106 = sor.u32 %s104, %s105
      %p107 = scmp.eq.s32.totalorder %s106, 0
      %s109 = sadd.s32 %s108, 1
      %s110 = scalar_select %p107, %s108, %s109
      %p113 = pneg %p107
      %p114 = scmp.eq.s32.totalorder %s14, 1
      %p115 = por %p113, %p114
      %p116 = scmp.ne.s32.totalorder %s108, %s111
      %p117 = scmp.eq.s32.totalorder %s14, 0
      %p118 = por %p116, %p117
      %p119 = scmp.ne.s32.totalorder %s108, %s111
      %p120 = scmp.eq.s32.totalorder %s19, 1
      %p121 = por %p119, %p120
      %p122 = scmp.ne.s32.totalorder %s111, %s112
      %p123 = scmp.eq.s32.totalorder %s19, 0
      %p124 = por %p122, %p123
      %p125 = scmp.ne.s32.totalorder %s111, %s112
      %p126 = scmp.eq.s32.totalorder %s20, 1
      %p127 = por %p125, %p126
      %p129 = scmp.ne.s32.totalorder %s112, %s128
      %p130 = scmp.eq.s32.totalorder %s20, 0
      %p131 = por %p129, %p130
      %p132 = scmp.le.s32.totalorder 1, %s14
      %p133 = scmp.lt.s32.totalorder %s14, 3
      %p134 = pnand %p132, %p133
      %p135 = pneg %p134
      // Predicated region
      $region9: #{downsampling_forward.1} parent=5 // pred_check
        _
      $region10: #{downsampling_forward.1} parent=5 // pred_check_branch
        %137 = sbr.rel (%p134) target = $region12
      $region11: #{downsampling_forward.1} parent=5 // pred_region
        %s138 = ssub.s32 %s14, 1
        // Predicated region
        $region13: #{downsampling_forward.1} parent=11 // pred_check
          %p139 = pneg %p47
        $region14: #{downsampling_forward.1} parent=11 // pred_check_branch
          %141 = sbr.rel (%p139) target = $region16
        $region15: #{downsampling_forward.1} parent=11 // pred_region
          %s143 = ssub.s32 32, 32
          %144 = vsyncadd [#allocation4], %s143
          %s146 = sshll.u32 %s0, 4
          %s147 = int_to_ptr.vmem [resolvable:$true] %s146
          %149 = dma.vmem_to_smem %s147, 32, [#allocation2], [#allocation4]
        $region16: #{downsampling_forward.1} parent=11 // pred_fallthru
          _
        // Predicated region
        $region17: #{downsampling_forward.1} parent=11 // pred_check
          %p150 = pneg %p68
        $region18: #{downsampling_forward.1} parent=11 // pred_check_branch
          %152 = sbr.rel (%p150) target = $region20
        $region19: #{downsampling_forward.1} parent=11 // pred_region
          %s154 = ssub.s32 16, 16
          %155 = vsyncadd [#allocation6], %s154
          %s157 = sshll.u32 %s1, 4
          %s158 = int_to_ptr.vmem [resolvable:$true] %s157
          %160 = dma.vmem_to_smem %s158, 16, [#allocation5], [#allocation6]
        $region20: #{downsampling_forward.1} parent=11 // pred_fallthru
          _
      $region12: #{downsampling_forward.1} parent=5 // pred_fallthru
        _
      %p161 = scmp.lt.s32.totalorder %s14, 2
      // Predicated region
      $region21: #{downsampling_forward.1} parent=5 // pred_check
        %p162 = pneg %p161
      $region22: #{downsampling_forward.1} parent=5 // pred_check_branch
        %164 = sbr.rel (%p162) target = $region24
      $region23: #{downsampling_forward.1} parent=5 // pred_region
        // Predicated region
        $region25: #{downsampling_forward.1} parent=23 // pred_check
          %p165 = pneg %p90
        $region26: #{downsampling_forward.1} parent=23 // pred_check_branch
          %167 = sbr.rel (%p165) target = $region28
        $region27: #{downsampling_forward.1} parent=23 // pred_region
          %p168 = scmp.lt.s32.totalorder %s21, 1
          %s169 = scalar_select %p168, %s21, 1
          %p170 = scmp.lt.s32.totalorder %s22, 0
          %s171 = scalar_select %p170, %s22, 0
          %s172 = smul.addr %s169, 24
          %s173 = sadd.s32 %s171, %s172
          %s174 = smul.addr %s173, 8
          %s175 = scalar_lea.vmem %s2, %s174
        $region28: #{downsampling_forward.1} parent=23 // pred_fallthru
          _
      $region24: #{downsampling_forward.1} parent=5 // pred_fallthru
        _
      %p176 = scmp.le.s32.totalorder 1, %s14
      %p177 = scmp.lt.s32.totalorder %s14, 3
      %p178 = pnand %p176, %p177
      %p179 = pneg %p178
      // Predicated region
      $region29: #{downsampling_forward.1} parent=5 // pred_check
        _
      $region30: #{downsampling_forward.1} parent=5 // pred_check_branch
        %181 = sbr.rel (%p178) target = $region32
      $region31: #{downsampling_forward.1} parent=5 // pred_region
        %s182 = ssub.s32 %s14, 1
        // Predicated region
        $region33: #{downsampling_forward.1} parent=31 // pred_check
          %p183 = pneg %p47
        $region34: #{downsampling_forward.1} parent=31 // pred_check_branch
          %185 = sbr.rel (%p183) target = $region36
        $region35: #{downsampling_forward.1} parent=31 // pred_region
          %186 = dma.done [#allocation4], 32
        $region36: #{downsampling_forward.1} parent=31 // pred_fallthru
          _
        // Predicated region
        $region37: #{downsampling_forward.1} parent=31 // pred_check
          %p187 = pneg %p68
        $region38: #{downsampling_forward.1} parent=31 // pred_check_branch
          %189 = sbr.rel (%p187) target = $region40
        $region39: #{downsampling_forward.1} parent=31 // pred_region
          %190 = dma.done [#allocation6], 16
        $region40: #{downsampling_forward.1} parent=31 // pred_fallthru
          _
        %191 = sfence
        %p192 = pneg %p47
        %p193 = pneg %p44
        %p194 = pneg %p68
        %p195 = pneg %p65
        %p196 = scmp.lt.s32.totalorder %s23, 1
        %s197 = scalar_select %p196, %s23, 1
        %p198 = scmp.lt.s32.totalorder %s24, 0
        %s199 = scalar_select %p198, %s24, 0
        %s200 = smul.addr %s197, 24
        %s201 = sadd.s32 %s199, %s200
        %s202 = smul.addr %s201, 8
        %s203 = scalar_lea.vmem %s2, %s202
        %p204 = pneg %p96
        %p205 = pneg %p93
        %p206 = pneg %p124
        %p207 = pneg %p121
        %s208 = sand.u32 %s111, 1
        %s209 = scalar_lea.sflag [#allocation3], %s208
        %s210 = sand.u32 %s111, 1
        %s211 = smul.addr %s210, 32
        %s212 = scalar_lea.vmem [#allocation7], %s211
        %p213 = scmp.lt.s32.totalorder %s23, 1
        %s214 = scalar_select %p213, %s23, 1
        %p215 = scmp.lt.s32.totalorder %s24, 0
        %s216 = scalar_select %p215, %s24, 0
        %s217 = smul.addr %s214, 24
        %s218 = sadd.s32 %s216, %s217
        %s219 = smul.addr %s218, 8
        %s220 = scalar_lea.vmem %s2, %s219
        %v221 = vld [vmem:[%s220] sm:$0xff]
        %s222 = scalar_lea.vmem %s220, 8
        %v223 = vld [vmem:[%s222] sm:$0xff]
        %s224 = scalar_lea.vmem %s220, 16
        %v225 = vld [vmem:[%s224] sm:$0xff]
        %s226 = scalar_lea.vmem %s220, 24
        %v227 = vld [vmem:[%s226] sm:$0xff]
        %s228 = scalar_lea.vmem %s220, 32
        %v229 = vld [vmem:[%s228] sm:$0xff]
        %s230 = scalar_lea.vmem %s220, 40
        %v231 = vld [vmem:[%s230] sm:$0xff]
        %s232 = scalar_lea.vmem %s220, 48
        %v233 = vld [vmem:[%s232] sm:$0xff]
        %s234 = scalar_lea.vmem %s220, 56
        %v235 = vld [vmem:[%s234] sm:$0xff]
        %s236 = scalar_lea.vmem %s220, 64
        %v237 = vld [vmem:[%s236] sm:$0xff]
        %s238 = scalar_lea.vmem %s220, 72
        %v239 = vld [vmem:[%s238] sm:$0xff]
        %s240 = scalar_lea.vmem %s220, 80
        %v241 = vld [vmem:[%s240] sm:$0xff]
        %s242 = scalar_lea.vmem %s220, 88
        %v243 = vld [vmem:[%s242] sm:$0xff]
        %s244 = scalar_lea.vmem %s220, 96
        %v245 = vld [vmem:[%s244] sm:$0xff]
        %s246 = scalar_lea.vmem %s220, 104
        %v247 = vld [vmem:[%s246] sm:$0xff]
        %s248 = scalar_lea.vmem %s220, 112
        %v249 = vld [vmem:[%s248] sm:$0xff]
        %s250 = scalar_lea.vmem %s220, 120
        %v251 = vld [vmem:[%s250] sm:$0xff]
        %s252 = scalar_lea.vmem %s220, 128
        %v253 = vld [vmem:[%s252] sm:$0xff]
        %s254 = scalar_lea.vmem %s220, 136
        %v255 = vld [vmem:[%s254] sm:$0xff]
        %s256 = scalar_lea.vmem %s220, 144
        %v257 = vld [vmem:[%s256] sm:$0xff]
        %s258 = scalar_lea.vmem %s220, 152
        %v259 = vld [vmem:[%s258] sm:$0xff]
        %s260 = scalar_lea.vmem %s220, 160
        %v261 = vld [vmem:[%s260] sm:$0xff]
        %s262 = scalar_lea.vmem %s220, 168
        %v263 = vld [vmem:[%s262] sm:$0xff]
        %s264 = scalar_lea.vmem %s220, 176
        %v265 = vld [vmem:[%s264] sm:$0xff]
        %s266 = scalar_lea.vmem %s220, 184
        %v267 = vld [vmem:[%s266] sm:$0xff]
        %s268 = sld [smem:[#allocation2]]
        %v269 = vstv %s268
        %v270 = vmul.f32 %v269, %v221
        %v271 = vadd.f32 %v270, 0.0
        %s272 = sld [smem:[#allocation2 + $0x1]]
        %v273 = vstv %s272
        %v274 = vmul.f32 %v273, %v229
        %v275 = vadd.f32 %v271, %v274
        %s276 = sld [smem:[#allocation2 + $0x2]]
        %v277 = vstv %s276
        %v278 = vmul.f32 %v277, %v221
        %280 = vrot.lane.b32.xlu0 %v278, 127
        %v281 = vpop.permute.xlu0 %280
        %v283 = vadd.f32 %v275, %v281
        %s284 = sld [smem:[#allocation2 + $0x3]]
        %v285 = vstv %s284
        %v286 = vmul.f32 %v285, %v237
        %v287 = vadd.f32 %v283, %v286
        %s288 = sld [smem:[#allocation2 + $0x4]]
        %v289 = vstv %s288
        %v290 = vmul.f32 %v289, %v245
        %v291 = vadd.f32 %v287, %v290
        %s292 = sld [smem:[#allocation2 + $0x5]]
        %v293 = vstv %s292
        %v294 = vmul.f32 %v293, %v237
        %296 = vrot.lane.b32.xlu0 %v294, 127
        %v297 = vpop.permute.xlu0 %296
        %v299 = vadd.f32 %v291, %v297
        %s300 = sld [smem:[#allocation2 + $0x6]]
        %v301 = vstv %s300
        %v302 = vmul.f32 %v301, %v253
        %v303 = vadd.f32 %v299, %v302
        %s304 = sld [smem:[#allocation2 + $0x7]]
        %v305 = vstv %s304
        %v306 = vmul.f32 %v305, %v261
        %v307 = vadd.f32 %v303, %v306
        %s308 = sld [smem:[#allocation2 + $0x8]]
        %v309 = vstv %s308
        %v310 = vmul.f32 %v309, %v253
        %312 = vrot.lane.b32.xlu0 %v310, 127
        %v313 = vpop.permute.xlu0 %312
        %v315 = vadd.f32 %v307, %v313
        %s316 = sld [smem:[#allocation2 + $0x9]]
        %v317 = vstv %s316
        %v318 = vmul.f32 %v317, %v223
        %v319 = vadd.f32 %v315, %v318
        %s320 = sld [smem:[#allocation2 + $0xa]]
        %v321 = vstv %s320
        %v322 = vmul.f32 %v321, %v231
        %v323 = vadd.f32 %v319, %v322
        %s324 = sld [smem:[#allocation2 + $0xb]]
        %v325 = vstv %s324
        %v326 = vmul.f32 %v325, %v223
        %328 = vrot.lane.b32.xlu0 %v326, 127
        %v329 = vpop.permute.xlu0 %328
        %v331 = vadd.f32 %v323, %v329
        %s332 = sld [smem:[#allocation2 + $0xc]]
        %v333 = vstv %s332
        %v334 = vmul.f32 %v333, %v239
        %v335 = vadd.f32 %v331, %v334
        %s336 = sld [smem:[#allocation2 + $0xd]]
        %v337 = vstv %s336
        %v338 = vmul.f32 %v337, %v247
        %v339 = vadd.f32 %v335, %v338
        %s340 = sld [smem:[#allocation2 + $0xe]]
        %v341 = vstv %s340
        %v342 = vmul.f32 %v341, %v239
        %344 = vrot.lane.b32.xlu0 %v342, 127
        %v345 = vpop.permute.xlu0 %344
        %v347 = vadd.f32 %v339, %v345
        %s348 = sld [smem:[#allocation2 + $0xf]]
        %v349 = vstv %s348
        %v350 = vmul.f32 %v349, %v255
        %v351 = vadd.f32 %v347, %v350
        %s352 = sld [smem:[#allocation2 + $0x10]]
        %v353 = vstv %s352
        %v354 = vmul.f32 %v353, %v263
        %v355 = vadd.f32 %v351, %v354
        %s356 = sld [smem:[#allocation2 + $0x11]]
        %v357 = vstv %s356
        %v358 = vmul.f32 %v357, %v255
        %360 = vrot.lane.b32.xlu0 %v358, 127
        %v361 = vpop.permute.xlu0 %360
        %v363 = vadd.f32 %v355, %v361
        %s364 = sld [smem:[#allocation2 + $0x12]]
        %v365 = vstv %s364
        %v366 = vmul.f32 %v365, %v225
        %v367 = vadd.f32 %v363, %v366
        %s368 = sld [smem:[#allocation2 + $0x13]]
        %v369 = vstv %s368
        %v370 = vmul.f32 %v369, %v233
        %v371 = vadd.f32 %v367, %v370
        %s372 = sld [smem:[#allocation2 + $0x14]]
        %v373 = vstv %s372
        %v374 = vmul.f32 %v373, %v225
        %376 = vrot.lane.b32.xlu0 %v374, 127
        %v377 = vpop.permute.xlu0 %376
        %v379 = vadd.f32 %v371, %v377
        %s380 = sld [smem:[#allocation2 + $0x15]]
        %v381 = vstv %s380
        %v382 = vmul.f32 %v381, %v241
        %v383 = vadd.f32 %v379, %v382
        %s384 = sld [smem:[#allocation2 + $0x16]]
        %v385 = vstv %s384
        %v386 = vmul.f32 %v385, %v249
        %v387 = vadd.f32 %v383, %v386
        %s388 = sld [smem:[#allocation2 + $0x17]]
        %v389 = vstv %s388
        %v390 = vmul.f32 %v389, %v241
        %392 = vrot.lane.b32.xlu0 %v390, 127
        %v393 = vpop.permute.xlu0 %392
        %v395 = vadd.f32 %v387, %v393
        %s396 = sld [smem:[#allocation2 + $0x18]]
        %v397 = vstv %s396
        %v398 = vmul.f32 %v397, %v257
        %v399 = vadd.f32 %v395, %v398
        %s400 = sld [smem:[#allocation2 + $0x19]]
        %v401 = vstv %s400
        %v402 = vmul.f32 %v401, %v265
        %v403 = vadd.f32 %v399, %v402
        %s404 = sld [smem:[#allocation2 + $0x1a]]
        %v405 = vstv %s404
        %v406 = vmul.f32 %v405, %v257
        %408 = vrot.lane.b32.xlu0 %v406, 127
        %v409 = vpop.permute.xlu0 %408
        %v411 = vadd.f32 %v403, %v409
        %s412 = sld [smem:[#allocation2 + $0x1b]]
        %v413 = vstv %s412
        %v414 = vmul.f32 %v413, %v227
        %v415 = vadd.f32 %v411, %v414
        %s416 = sld [smem:[#allocation2 + $0x1c]]
        %v417 = vstv %s416
        %v418 = vmul.f32 %v417, %v235
        %v419 = vadd.f32 %v415, %v418
        %s420 = sld [smem:[#allocation2 + $0x1d]]
        %v421 = vstv %s420
        %v422 = vmul.f32 %v421, %v227
        %424 = vrot.lane.b32.xlu0 %v422, 127
        %v425 = vpop.permute.xlu0 %424
        %v427 = vadd.f32 %v419, %v425
        %s428 = sld [smem:[#allocation2 + $0x1e]]
        %v429 = vstv %s428
        %v430 = vmul.f32 %v429, %v243
        %v431 = vadd.f32 %v427, %v430
        %s432 = sld [smem:[#allocation2 + $0x1f]]
        %v433 = vstv %s432
        %v434 = vmul.f32 %v433, %v251
        %v435 = vadd.f32 %v431, %v434
        %s436 = sld [smem:[#allocation2 + $0x20]]
        %v437 = vstv %s436
        %v438 = vmul.f32 %v437, %v243
        %440 = vrot.lane.b32.xlu0 %v438, 127
        %v441 = vpop.permute.xlu0 %440
        %v443 = vadd.f32 %v435, %v441
        %s444 = sld [smem:[#allocation2 + $0x21]]
        %v445 = vstv %s444
        %v446 = vmul.f32 %v445, %v259
        %v447 = vadd.f32 %v443, %v446
        %s448 = sld [smem:[#allocation2 + $0x22]]
        %v449 = vstv %s448
        %v450 = vmul.f32 %v449, %v267
        %v451 = vadd.f32 %v447, %v450
        %s452 = sld [smem:[#allocation2 + $0x23]]
        %v453 = vstv %s452
        %v454 = vmul.f32 %v453, %v259
        %456 = vrot.lane.b32.xlu0 %v454, 127
        %v457 = vpop.permute.xlu0 %456
        %v459 = vadd.f32 %v451, %v457
        %s460 = sld [smem:[#allocation5]]
        %v461 = vstv %s460
        %v462 = vadd.f32 %v459, %v461
        %vm463 = vcmp.ge.f32.partialorder %v462, 0.0
        %v464 = vmul.f32 %v462, 0.01
        %v465 = vsel %vm463, %v462, %v464
        %vm466 = vcmask 64512
        %467 = vst.msk [vmem:[%s212] sm:$0xff] %vm466, %v465
        %s468 = sld [smem:[#allocation2 + $0x24]]
        %v469 = vstv %s468
        %v470 = vmul.f32 %v469, %v221
        %v471 = vadd.f32 %v470, 0.0
        %s472 = sld [smem:[#allocation2 + $0x25]]
        %v473 = vstv %s472
        %v474 = vmul.f32 %v473, %v229
        %v475 = vadd.f32 %v471, %v474
        %s476 = sld [smem:[#allocation2 + $0x26]]
        %v477 = vstv %s476
        %v478 = vmul.f32 %v477, %v221
        %480 = vrot.lane.b32.xlu0 %v478, 127
        %v481 = vpop.permute.xlu0 %480
        %v483 = vadd.f32 %v475, %v481
        %s484 = sld [smem:[#allocation2 + $0x27]]
        %v485 = vstv %s484
        %v486 = vmul.f32 %v485, %v237
        %v487 = vadd.f32 %v483, %v486
        %s488 = sld [smem:[#allocation2 + $0x28]]
        %v489 = vstv %s488
        %v490 = vmul.f32 %v489, %v245
        %v491 = vadd.f32 %v487, %v490
        %s492 = sld [smem:[#allocation2 + $0x29]]
        %v493 = vstv %s492
        %v494 = vmul.f32 %v493, %v237
        %496 = vrot.lane.b32.xlu0 %v494, 127
        %v497 = vpop.permute.xlu0 %496
        %v499 = vadd.f32 %v491, %v497
        %s500 = sld [smem:[#allocation2 + $0x2a]]
        %v501 = vstv %s500
        %v502 = vmul.f32 %v501, %v253
        %v503 = vadd.f32 %v499, %v502
        %s504 = sld [smem:[#allocation2 + $0x2b]]
        %v505 = vstv %s504
        %v506 = vmul.f32 %v505, %v261
        %v507 = vadd.f32 %v503, %v506
        %s508 = sld [smem:[#allocation2 + $0x2c]]
        %v509 = vstv %s508
        %v510 = vmul.f32 %v509, %v253
        %512 = vrot.lane.b32.xlu0 %v510, 127
        %v513 = vpop.permute.xlu0 %512
        %v515 = vadd.f32 %v507, %v513
        %s516 = sld [smem:[#allocation2 + $0x2d]]
        %v517 = vstv %s516
        %v518 = vmul.f32 %v517, %v223
        %v519 = vadd.f32 %v515, %v518
        %s520 = sld [smem:[#allocation2 + $0x2e]]
        %v521 = vstv %s520
        %v522 = vmul.f32 %v521, %v231
        %v523 = vadd.f32 %v519, %v522
        %s524 = sld [smem:[#allocation2 + $0x2f]]
        %v525 = vstv %s524
        %v526 = vmul.f32 %v525, %v223
        %528 = vrot.lane.b32.xlu0 %v526, 127
        %v529 = vpop.permute.xlu0 %528
        %v531 = vadd.f32 %v523, %v529
        %s532 = sld [smem:[#allocation2 + $0x30]]
        %v533 = vstv %s532
        %v534 = vmul.f32 %v533, %v239
        %v535 = vadd.f32 %v531, %v534
        %s536 = sld [smem:[#allocation2 + $0x31]]
        %v537 = vstv %s536
        %v538 = vmul.f32 %v537, %v247
        %v539 = vadd.f32 %v535, %v538
        %s540 = sld [smem:[#allocation2 + $0x32]]
        %v541 = vstv %s540
        %v542 = vmul.f32 %v541, %v239
        %544 = vrot.lane.b32.xlu0 %v542, 127
        %v545 = vpop.permute.xlu0 %544
        %v547 = vadd.f32 %v539, %v545
        %s548 = sld [smem:[#allocation2 + $0x33]]
        %v549 = vstv %s548
        %v550 = vmul.f32 %v549, %v255
        %v551 = vadd.f32 %v547, %v550
        %s552 = sld [smem:[#allocation2 + $0x34]]
        %v553 = vstv %s552
        %v554 = vmul.f32 %v553, %v263
        %v555 = vadd.f32 %v551, %v554
        %s556 = sld [smem:[#allocation2 + $0x35]]
        %v557 = vstv %s556
        %v558 = vmul.f32 %v557, %v255
        %560 = vrot.lane.b32.xlu0 %v558, 127
        %v561 = vpop.permute.xlu0 %560
        %v563 = vadd.f32 %v555, %v561
        %s564 = sld [smem:[#allocation2 + $0x36]]
        %v565 = vstv %s564
        %v566 = vmul.f32 %v565, %v225
        %v567 = vadd.f32 %v563, %v566
        %s568 = sld [smem:[#allocation2 + $0x37]]
        %v569 = vstv %s568
        %v570 = vmul.f32 %v569, %v233
        %v571 = vadd.f32 %v567, %v570
        %s572 = sld [smem:[#allocation2 + $0x38]]
        %v573 = vstv %s572
        %v574 = vmul.f32 %v573, %v225
        %576 = vrot.lane.b32.xlu0 %v574, 127
        %v577 = vpop.permute.xlu0 %576
        %v579 = vadd.f32 %v571, %v577
        %s580 = sld [smem:[#allocation2 + $0x39]]
        %v581 = vstv %s580
        %v582 = vmul.f32 %v581, %v241
        %v583 = vadd.f32 %v579, %v582
        %s584 = sld [smem:[#allocation2 + $0x3a]]
        %v585 = vstv %s584
        %v586 = vmul.f32 %v585, %v249
        %v587 = vadd.f32 %v583, %v586
        %s588 = sld [smem:[#allocation2 + $0x3b]]
        %v589 = vstv %s588
        %v590 = vmul.f32 %v589, %v241
        %592 = vrot.lane.b32.xlu0 %v590, 127
        %v593 = vpop.permute.xlu0 %592
        %v595 = vadd.f32 %v587, %v593
        %s596 = sld [smem:[#allocation2 + $0x3c]]
        %v597 = vstv %s596
        %v598 = vmul.f32 %v597, %v257
        %v599 = vadd.f32 %v595, %v598
        %s600 = sld [smem:[#allocation2 + $0x3d]]
        %v601 = vstv %s600
        %v602 = vmul.f32 %v601, %v265
        %v603 = vadd.f32 %v599, %v602
        %s604 = sld [smem:[#allocation2 + $0x3e]]
        %v605 = vstv %s604
        %v606 = vmul.f32 %v605, %v257
        %608 = vrot.lane.b32.xlu0 %v606, 127
        %v609 = vpop.permute.xlu0 %608
        %v611 = vadd.f32 %v603, %v609
        %s612 = sld [smem:[#allocation2 + $0x3f]]
        %v613 = vstv %s612
        %v614 = vmul.f32 %v613, %v227
        %v615 = vadd.f32 %v611, %v614
        %s616 = sld [smem:[#allocation2 + $0x40]]
        %v617 = vstv %s616
        %v618 = vmul.f32 %v617, %v235
        %v619 = vadd.f32 %v615, %v618
        %s620 = sld [smem:[#allocation2 + $0x41]]
        %v621 = vstv %s620
        %v622 = vmul.f32 %v621, %v227
        %624 = vrot.lane.b32.xlu0 %v622, 127
        %v625 = vpop.permute.xlu0 %624
        %v627 = vadd.f32 %v619, %v625
        %s628 = sld [smem:[#allocation2 + $0x42]]
        %v629 = vstv %s628
        %v630 = vmul.f32 %v629, %v243
        %v631 = vadd.f32 %v627, %v630
        %s632 = sld [smem:[#allocation2 + $0x43]]
        %v633 = vstv %s632
        %v634 = vmul.f32 %v633, %v251
        %v635 = vadd.f32 %v631, %v634
        %s636 = sld [smem:[#allocation2 + $0x44]]
        %v637 = vstv %s636
        %v638 = vmul.f32 %v637, %v243
        %640 = vrot.lane.b32.xlu0 %v638, 127
        %v641 = vpop.permute.xlu0 %640
        %v643 = vadd.f32 %v635, %v641
        %s644 = sld [smem:[#allocation2 + $0x45]]
        %v645 = vstv %s644
        %v646 = vmul.f32 %v645, %v259
        %v647 = vadd.f32 %v643, %v646
        %s648 = sld [smem:[#allocation2 + $0x46]]
        %v649 = vstv %s648
        %v650 = vmul.f32 %v649, %v267
        %v651 = vadd.f32 %v647, %v650
        %s652 = sld [smem:[#allocation2 + $0x47]]
        %v653 = vstv %s652
        %v654 = vmul.f32 %v653, %v259
        %656 = vrot.lane.b32.xlu0 %v654, 127
        %v657 = vpop.permute.xlu0 %656
        %v659 = vadd.f32 %v651, %v657
        %s660 = sld [smem:[#allocation5 + $0x1]]
        %v661 = vstv %s660
        %v662 = vadd.f32 %v659, %v661
        %vm663 = vcmp.ge.f32.partialorder %v662, 0.0
        %v664 = vmul.f32 %v662, 0.01
        %v665 = vsel %vm663, %v662, %v664
        %s666 = scalar_lea.vmem %s212, 8 [#allocation7]
        %667 = vst.msk [vmem:[%s666] sm:$0xff] %vm466, %v665
        %s668 = sld [smem:[#allocation2 + $0x48]]
        %v669 = vstv %s668
        %v670 = vmul.f32 %v669, %v221
        %v671 = vadd.f32 %v670, 0.0
        %s672 = sld [smem:[#allocation2 + $0x49]]
        %v673 = vstv %s672
        %v674 = vmul.f32 %v673, %v229
        %v675 = vadd.f32 %v671, %v674
        %s676 = sld [smem:[#allocation2 + $0x4a]]
        %v677 = vstv %s676
        %v678 = vmul.f32 %v677, %v221
        %680 = vrot.lane.b32.xlu0 %v678, 127
        %v681 = vpop.permute.xlu0 %680
        %v683 = vadd.f32 %v675, %v681
        %s684 = sld [smem:[#allocation2 + $0x4b]]
        %v685 = vstv %s684
        %v686 = vmul.f32 %v685, %v237
        %v687 = vadd.f32 %v683, %v686
        %s688 = sld [smem:[#allocation2 + $0x4c]]
        %v689 = vstv %s688
        %v690 = vmul.f32 %v689, %v245
        %v691 = vadd.f32 %v687, %v690
        %s692 = sld [smem:[#allocation2 + $0x4d]]
        %v693 = vstv %s692
        %v694 = vmul.f32 %v693, %v237
        %696 = vrot.lane.b32.xlu0 %v694, 127
        %v697 = vpop.permute.xlu0 %696
        %v699 = vadd.f32 %v691, %v697
        %s700 = sld [smem:[#allocation2 + $0x4e]]
        %v701 = vstv %s700
        %v702 = vmul.f32 %v701, %v253
        %v703 = vadd.f32 %v699, %v702
        %s704 = sld [smem:[#allocation2 + $0x4f]]
        %v705 = vstv %s704
        %v706 = vmul.f32 %v705, %v261
        %v707 = vadd.f32 %v703, %v706
        %s708 = sld [smem:[#allocation2 + $0x50]]
        %v709 = vstv %s708
        %v710 = vmul.f32 %v709, %v253
        %712 = vrot.lane.b32.xlu0 %v710, 127
        %v713 = vpop.permute.xlu0 %712
        %v715 = vadd.f32 %v707, %v713
        %s716 = sld [smem:[#allocation2 + $0x51]]
        %v717 = vstv %s716
        %v718 = vmul.f32 %v717, %v223
        %v719 = vadd.f32 %v715, %v718
        %s720 = sld [smem:[#allocation2 + $0x52]]
        %v721 = vstv %s720
        %v722 = vmul.f32 %v721, %v231
        %v723 = vadd.f32 %v719, %v722
        %s724 = sld [smem:[#allocation2 + $0x53]]
        %v725 = vstv %s724
        %v726 = vmul.f32 %v725, %v223
        %728 = vrot.lane.b32.xlu0 %v726, 127
        %v729 = vpop.permute.xlu0 %728
        %v731 = vadd.f32 %v723, %v729
        %s732 = sld [smem:[#allocation2 + $0x54]]
        %v733 = vstv %s732
        %v734 = vmul.f32 %v733, %v239
        %v735 = vadd.f32 %v731, %v734
        %s736 = sld [smem:[#allocation2 + $0x55]]
        %v737 = vstv %s736
        %v738 = vmul.f32 %v737, %v247
        %v739 = vadd.f32 %v735, %v738
        %s740 = sld [smem:[#allocation2 + $0x56]]
        %v741 = vstv %s740
        %v742 = vmul.f32 %v741, %v239
        %744 = vrot.lane.b32.xlu0 %v742, 127
        %v745 = vpop.permute.xlu0 %744
        %v747 = vadd.f32 %v739, %v745
        %s748 = sld [smem:[#allocation2 + $0x57]]
        %v749 = vstv %s748
        %v750 = vmul.f32 %v749, %v255
        %v751 = vadd.f32 %v747, %v750
        %s752 = sld [smem:[#allocation2 + $0x58]]
        %v753 = vstv %s752
        %v754 = vmul.f32 %v753, %v263
        %v755 = vadd.f32 %v751, %v754
        %s756 = sld [smem:[#allocation2 + $0x59]]
        %v757 = vstv %s756
        %v758 = vmul.f32 %v757, %v255
        %760 = vrot.lane.b32.xlu0 %v758, 127
        %v761 = vpop.permute.xlu0 %760
        %v763 = vadd.f32 %v755, %v761
        %s764 = sld [smem:[#allocation2 + $0x5a]]
        %v765 = vstv %s764
        %v766 = vmul.f32 %v765, %v225
        %v767 = vadd.f32 %v763, %v766
        %s768 = sld [smem:[#allocation2 + $0x5b]]
        %v769 = vstv %s768
        %v770 = vmul.f32 %v769, %v233
        %v771 = vadd.f32 %v767, %v770
        %s772 = sld [smem:[#allocation2 + $0x5c]]
        %v773 = vstv %s772
        %v774 = vmul.f32 %v773, %v225
        %776 = vrot.lane.b32.xlu0 %v774, 127
        %v777 = vpop.permute.xlu0 %776
        %v779 = vadd.f32 %v771, %v777
        %s780 = sld [smem:[#allocation2 + $0x5d]]
        %v781 = vstv %s780
        %v782 = vmul.f32 %v781, %v241
        %v783 = vadd.f32 %v779, %v782
        %s784 = sld [smem:[#allocation2 + $0x5e]]
        %v785 = vstv %s784
        %v786 = vmul.f32 %v785, %v249
        %v787 = vadd.f32 %v783, %v786
        %s788 = sld [smem:[#allocation2 + $0x5f]]
        %v789 = vstv %s788
        %v790 = vmul.f32 %v789, %v241
        %792 = vrot.lane.b32.xlu0 %v790, 127
        %v793 = vpop.permute.xlu0 %792
        %v795 = vadd.f32 %v787, %v793
        %s796 = sld [smem:[#allocation2 + $0x60]]
        %v797 = vstv %s796
        %v798 = vmul.f32 %v797, %v257
        %v799 = vadd.f32 %v795, %v798
        %s800 = sld [smem:[#allocation2 + $0x61]]
        %v801 = vstv %s800
        %v802 = vmul.f32 %v801, %v265
        %v803 = vadd.f32 %v799, %v802
        %s804 = sld [smem:[#allocation2 + $0x62]]
        %v805 = vstv %s804
        %v806 = vmul.f32 %v805, %v257
        %808 = vrot.lane.b32.xlu0 %v806, 127
        %v809 = vpop.permute.xlu0 %808
        %v811 = vadd.f32 %v803, %v809
        %s812 = sld [smem:[#allocation2 + $0x63]]
        %v813 = vstv %s812
        %v814 = vmul.f32 %v813, %v227
        %v815 = vadd.f32 %v811, %v814
        %s816 = sld [smem:[#allocation2 + $0x64]]
        %v817 = vstv %s816
        %v818 = vmul.f32 %v817, %v235
        %v819 = vadd.f32 %v815, %v818
        %s820 = sld [smem:[#allocation2 + $0x65]]
        %v821 = vstv %s820
        %v822 = vmul.f32 %v821, %v227
        %824 = vrot.lane.b32.xlu0 %v822, 127
        %v825 = vpop.permute.xlu0 %824
        %v827 = vadd.f32 %v819, %v825
        %s828 = sld [smem:[#allocation2 + $0x66]]
        %v829 = vstv %s828
        %v830 = vmul.f32 %v829, %v243
        %v831 = vadd.f32 %v827, %v830
        %s832 = sld [smem:[#allocation2 + $0x67]]
        %v833 = vstv %s832
        %v834 = vmul.f32 %v833, %v251
        %v835 = vadd.f32 %v831, %v834
        %s836 = sld [smem:[#allocation2 + $0x68]]
        %v837 = vstv %s836
        %v838 = vmul.f32 %v837, %v243
        %840 = vrot.lane.b32.xlu0 %v838, 127
        %v841 = vpop.permute.xlu0 %840
        %v843 = vadd.f32 %v835, %v841
        %s844 = sld [smem:[#allocation2 + $0x69]]
        %v845 = vstv %s844
        %v846 = vmul.f32 %v845, %v259
        %v847 = vadd.f32 %v843, %v846
        %s848 = sld [smem:[#allocation2 + $0x6a]]
        %v849 = vstv %s848
        %v850 = vmul.f32 %v849, %v267
        %v851 = vadd.f32 %v847, %v850
        %s852 = sld [smem:[#allocation2 + $0x6b]]
        %v853 = vstv %s852
        %v854 = vmul.f32 %v853, %v259
        %856 = vrot.lane.b32.xlu0 %v854, 127
        %v857 = vpop.permute.xlu0 %856
        %v859 = vadd.f32 %v851, %v857
        %s860 = sld [smem:[#allocation5 + $0x2]]
        %v861 = vstv %s860
        %v862 = vadd.f32 %v859, %v861
        %vm863 = vcmp.ge.f32.partialorder %v862, 0.0
        %v864 = vmul.f32 %v862, 0.01
        %v865 = vsel %vm863, %v862, %v864
        %s866 = scalar_lea.vmem %s212, 16 [#allocation7]
        %867 = vst.msk [vmem:[%s866] sm:$0xff] %vm466, %v865
        %s868 = sld [smem:[#allocation2 + $0x6c]]
        %v869 = vstv %s868
        %v870 = vmul.f32 %v869, %v221
        %v871 = vadd.f32 %v870, 0.0
        %s872 = sld [smem:[#allocation2 + $0x6d]]
        %v873 = vstv %s872
        %v874 = vmul.f32 %v873, %v229
        %v875 = vadd.f32 %v871, %v874
        %s876 = sld [smem:[#allocation2 + $0x6e]]
        %v877 = vstv %s876
        %v878 = vmul.f32 %v877, %v221
        %880 = vrot.lane.b32.xlu0 %v878, 127
        %v881 = vpop.permute.xlu0 %880
        %v883 = vadd.f32 %v875, %v881
        %s884 = sld [smem:[#allocation2 + $0x6f]]
        %v885 = vstv %s884
        %v886 = vmul.f32 %v885, %v237
        %v887 = vadd.f32 %v883, %v886
        %s888 = sld [smem:[#allocation2 + $0x70]]
        %v889 = vstv %s888
        %v890 = vmul.f32 %v889, %v245
        %v891 = vadd.f32 %v887, %v890
        %s892 = sld [smem:[#allocation2 + $0x71]]
        %v893 = vstv %s892
        %v894 = vmul.f32 %v893, %v237
        %896 = vrot.lane.b32.xlu0 %v894, 127
        %v897 = vpop.permute.xlu0 %896
        %v899 = vadd.f32 %v891, %v897
        %s900 = sld [smem:[#allocation2 + $0x72]]
        %v901 = vstv %s900
        %v902 = vmul.f32 %v901, %v253
        %v903 = vadd.f32 %v899, %v902
        %s904 = sld [smem:[#allocation2 + $0x73]]
        %v905 = vstv %s904
        %v906 = vmul.f32 %v905, %v261
        %v907 = vadd.f32 %v903, %v906
        %s908 = sld [smem:[#allocation2 + $0x74]]
        %v909 = vstv %s908
        %v910 = vmul.f32 %v909, %v253
        %912 = vrot.lane.b32.xlu0 %v910, 127
        %v913 = vpop.permute.xlu0 %912
        %v915 = vadd.f32 %v907, %v913
        %s916 = sld [smem:[#allocation2 + $0x75]]
        %v917 = vstv %s916
        %v918 = vmul.f32 %v917, %v223
        %v919 = vadd.f32 %v915, %v918
        %s920 = sld [smem:[#allocation2 + $0x76]]
        %v921 = vstv %s920
        %v922 = vmul.f32 %v921, %v231
        %v923 = vadd.f32 %v919, %v922
        %s924 = sld [smem:[#allocation2 + $0x77]]
        %v925 = vstv %s924
        %v926 = vmul.f32 %v925, %v223
        %928 = vrot.lane.b32.xlu0 %v926, 127
        %v929 = vpop.permute.xlu0 %928
        %v931 = vadd.f32 %v923, %v929
        %s932 = sld [smem:[#allocation2 + $0x78]]
        %v933 = vstv %s932
        %v934 = vmul.f32 %v933, %v239
        %v935 = vadd.f32 %v931, %v934
        %s936 = sld [smem:[#allocation2 + $0x79]]
        %v937 = vstv %s936
        %v938 = vmul.f32 %v937, %v247
        %v939 = vadd.f32 %v935, %v938
        %s940 = sld [smem:[#allocation2 + $0x7a]]
        %v941 = vstv %s940
        %v942 = vmul.f32 %v941, %v239
        %944 = vrot.lane.b32.xlu0 %v942, 127
        %v945 = vpop.permute.xlu0 %944
        %v947 = vadd.f32 %v939, %v945
        %s948 = sld [smem:[#allocation2 + $0x7b]]
        %v949 = vstv %s948
        %v950 = vmul.f32 %v949, %v255
        %v951 = vadd.f32 %v947, %v950
        %s952 = sld [smem:[#allocation2 + $0x7c]]
        %v953 = vstv %s952
        %v954 = vmul.f32 %v953, %v263
        %v955 = vadd.f32 %v951, %v954
        %s956 = sld [smem:[#allocation2 + $0x7d]]
        %v957 = vstv %s956
        %v958 = vmul.f32 %v957, %v255
        %960 = vrot.lane.b32.xlu0 %v958, 127
        %v961 = vpop.permute.xlu0 %960
        %v963 = vadd.f32 %v955, %v961
        %s964 = sld [smem:[#allocation2 + $0x7e]]
        %v965 = vstv %s964
        %v966 = vmul.f32 %v965, %v225
        %v967 = vadd.f32 %v963, %v966
        %s968 = sld [smem:[#allocation2 + $0x7f]]
        %v969 = vstv %s968
        %v970 = vmul.f32 %v969, %v233
        %v971 = vadd.f32 %v967, %v970
        %s972 = sld [smem:[#allocation2 + $0x80]]
        %v973 = vstv %s972
        %v974 = vmul.f32 %v973, %v225
        %976 = vrot.lane.b32.xlu0 %v974, 127
        %v977 = vpop.permute.xlu0 %976
        %v979 = vadd.f32 %v971, %v977
        %s980 = sld [smem:[#allocation2 + $0x81]]
        %v981 = vstv %s980
        %v982 = vmul.f32 %v981, %v241
        %v983 = vadd.f32 %v979, %v982
        %s984 = sld [smem:[#allocation2 + $0x82]]
        %v985 = vstv %s984
        %v986 = vmul.f32 %v985, %v249
        %v987 = vadd.f32 %v983, %v986
        %s988 = sld [smem:[#allocation2 + $0x83]]
        %v989 = vstv %s988
        %v990 = vmul.f32 %v989, %v241
        %992 = vrot.lane.b32.xlu0 %v990, 127
        %v993 = vpop.permute.xlu0 %992
        %v995 = vadd.f32 %v987, %v993
        %s996 = sld [smem:[#allocation2 + $0x84]]
        %v997 = vstv %s996
        %v998 = vmul.f32 %v997, %v257
        %v999 = vadd.f32 %v995, %v998
        %s1000 = sld [smem:[#allocation2 + $0x85]]
        %v1001 = vstv %s1000
        %v1002 = vmul.f32 %v1001, %v265
        %v1003 = vadd.f32 %v999, %v1002
        %s1004 = sld [smem:[#allocation2 + $0x86]]
        %v1005 = vstv %s1004
        %v1006 = vmul.f32 %v1005, %v257
        %1008 = vrot.lane.b32.xlu0 %v1006, 127
        %v1009 = vpop.permute.xlu0 %1008
        %v1011 = vadd.f32 %v1003, %v1009
        %s1012 = sld [smem:[#allocation2 + $0x87]]
        %v1013 = vstv %s1012
        %v1014 = vmul.f32 %v1013, %v227
        %v1015 = vadd.f32 %v1011, %v1014
        %s1016 = sld [smem:[#allocation2 + $0x88]]
        %v1017 = vstv %s1016
        %v1018 = vmul.f32 %v1017, %v235
        %v1019 = vadd.f32 %v1015, %v1018
        %s1020 = sld [smem:[#allocation2 + $0x89]]
        %v1021 = vstv %s1020
        %v1022 = vmul.f32 %v1021, %v227
        %1024 = vrot.lane.b32.xlu0 %v1022, 127
        %v1025 = vpop.permute.xlu0 %1024
        %v1027 = vadd.f32 %v1019, %v1025
        %s1028 = sld [smem:[#allocation2 + $0x8a]]
        %v1029 = vstv %s1028
        %v1030 = vmul.f32 %v1029, %v243
        %v1031 = vadd.f32 %v1027, %v1030
        %s1032 = sld [smem:[#allocation2 + $0x8b]]
        %v1033 = vstv %s1032
        %v1034 = vmul.f32 %v1033, %v251
        %v1035 = vadd.f32 %v1031, %v1034
        %s1036 = sld [smem:[#allocation2 + $0x8c]]
        %v1037 = vstv %s1036
        %v1038 = vmul.f32 %v1037, %v243
        %1040 = vrot.lane.b32.xlu0 %v1038, 127
        %v1041 = vpop.permute.xlu0 %1040
        %v1043 = vadd.f32 %v1035, %v1041
        %s1044 = sld [smem:[#allocation2 + $0x8d]]
        %v1045 = vstv %s1044
        %v1046 = vmul.f32 %v1045, %v259
        %v1047 = vadd.f32 %v1043, %v1046
        %s1048 = sld [smem:[#allocation2 + $0x8e]]
        %v1049 = vstv %s1048
        %v1050 = vmul.f32 %v1049, %v267
        %v1051 = vadd.f32 %v1047, %v1050
        %s1052 = sld [smem:[#allocation2 + $0x8f]]
        %v1053 = vstv %s1052
        %v1054 = vmul.f32 %v1053, %v259
        %1056 = vrot.lane.b32.xlu0 %v1054, 127
        %v1057 = vpop.permute.xlu0 %1056
        %v1059 = vadd.f32 %v1051, %v1057
        %s1060 = sld [smem:[#allocation5 + $0x3]]
        %v1061 = vstv %s1060
        %v1062 = vadd.f32 %v1059, %v1061
        %vm1063 = vcmp.ge.f32.partialorder %v1062, 0.0
        %v1064 = vmul.f32 %v1062, 0.01
        %v1065 = vsel %vm1063, %v1062, %v1064
        %s1066 = scalar_lea.vmem %s212, 24 [#allocation7]
        %1067 = vst.msk [vmem:[%s1066] sm:$0xff] %vm466, %v1065
        %s1068 = sand.u32 %s111, 1
        %s1069 = scalar_lea.sflag [#allocation3], %s1068
        %s1070 = sand.u32 %s111, 1
        %s1071 = smul.addr %s1070, 32
        %s1072 = scalar_lea.vmem [#allocation7], %s1071
        // Predicated region
        $region41: #{downsampling_forward.1} parent=31 // pred_check
          %p1073 = pneg %p121
        $region42: #{downsampling_forward.1} parent=31 // pred_check_branch
          %1075 = sbr.rel (%p1073) target = $region44
        $region43: #{downsampling_forward.1} parent=31 // pred_region
          %s1077 = ssub.s32 512, 512
          %1078 = vsyncadd %s1069, %s1077
          %s1079 = smul.addr %s23, 4
          %s1080 = sadd.s32 %s24, %s1079
          %s1081 = smul.addr %s1080, 128
          %s1082 = scalar_lea.hbm %s3, %s1081
          %s1083 = sshll.u32 %s1072, 4
          %s1084 = int_to_ptr.vmem [resolvable:$true] %s1083
          %1089 = dma.vmem_to_hbm [thread:$0]  %s1084, 512, %s1082, %s1069, 128, 128, 8
        $region44: #{downsampling_forward.1} parent=31 // pred_fallthru
          _
      $region32: #{downsampling_forward.1} parent=5 // pred_fallthru
        _
      %p1090 = scmp.le.s32.totalorder 2, %s14
      // Predicated region
      $region45: #{downsampling_forward.1} parent=5 // pred_check
        %p1091 = pneg %p1090
      $region46: #{downsampling_forward.1} parent=5 // pred_check_branch
        %1093 = sbr.rel (%p1091) target = $region48
      $region47: #{downsampling_forward.1} parent=5 // pred_region
        %s1094 = ssub.s32 %s14, 2
        // Predicated region
        $region49: #{downsampling_forward.1} parent=47 // pred_check
          %p1095 = pneg %p127
        $region50: #{downsampling_forward.1} parent=47 // pred_check_branch
          %1097 = sbr.rel (%p1095) target = $region52
        $region51: #{downsampling_forward.1} parent=47 // pred_region
          %s1098 = sand.u32 %s112, 1
          %s1099 = scalar_lea.sflag [#allocation3], %s1098
          %s1100 = sand.u32 %s112, 1
          %s1101 = smul.addr %s1100, 32
          %s1102 = scalar_lea.vmem [#allocation7], %s1101
          %1103 = dma.done %s1099, 512
        $region52: #{downsampling_forward.1} parent=47 // pred_fallthru
          _
      $region48: #{downsampling_forward.1} parent=5 // pred_fallthru
        _
    $region6: #{downsampling_forward.1} parent=1 // loop_footer
      %s18 = sadd.s32 1, %s14
    $region7: #{downsampling_forward.1} parent=1 // loop_footer_branch
      %13 = sbr.rel target = $region3
    $region8: #{downsampling_forward.1} parent=1 // loop_exit
      _
    %1104 = vsyncpa [#allocation3], 1
    %s1105 = scalar_lea.sflag [#allocation3], 1
    %1106 = vsyncpa %s1105, 1
    %1107 = vsyncpa [#allocation4], 1
    %s1108 = scalar_lea.sflag [#allocation4], 1
    %1109 = vsyncpa %s1108, 1
    %1110 = vsyncpa [#allocation6], 1

</llo_original>
